<compile_context>
chip_gen: v7x
topology: tpu7x:2x2x1
jax: 0.10.0
libtpu: 0.0.40
codegen_flags: <defaults>
</compile_context>

<pallas_src>
import math

import jax
import jax.numpy as jnp
from jax.experimental import pallas as pl
from jax.experimental.pallas import tpu as pltpu

# ----------------------------- config (small, TPU-friendly) -----------------------------
NUM_TOTAL_TOKENS = 64      # nn.Embedding(num_total_tokens, hidden)
NUM_KNOB = 5               # nn.Embedding(num_knob + 1, hidden) -> 6 rows (padded to 8)
MAX_LEN = 100              # PositionalEncoding(max_len=100)    (padded to 128 rows)
HIDDEN = 128               # hidden_size (multiple of 128 -> lane-dense output)
B, S = 2, 8                # batch, sequence length


# ------------------------------------ kernel helpers ------------------------------------
def _gather_rows(idx, table_ref):
    """Exact row gather as a one-hot matmul on the MXU.

    idx: (M, 1) int32, table_ref: (V, H) f32 VMEM ref -> (M, H) f32.
    """
    table = table_ref[...]
    num_rows = table.shape[0]
    iota = jax.lax.broadcasted_iota(jnp.int32, (idx.shape[0], num_rows), 1)
    onehot = (iota == idx).astype(jnp.float32)
    return jax.lax.dot(onehot, table,
                       precision=jax.lax.Precision.HIGHEST,
                       preferred_element_type=jnp.float32)


def _make_knob_embedding_kernel(use_index: bool, add_graph: bool):
    """Fused KnobEmbedding forward: all lookups + adds in one kernel invocation."""
    def kernel(*refs):
        refs = list(refs)
        o_ref = refs.pop()                       # output (M, H)
        x_ref = refs.pop(0)                      # (M, 1) int32  or  (M, H) f32
        knob_ref = refs.pop(0)                   # (M, 1) int32
        pos_ref = refs.pop(0)                    # (M, 1) int32
        emb_ref = refs.pop(0) if use_index else None
        kemb_ref = refs.pop(0)
        pe_ref = refs.pop(0)
        g_ref = refs.pop(0) if add_graph else None

        if use_index:
            xe = _gather_rows(x_ref[...], emb_ref)          # self.embedding(x)
        else:
            xe = x_ref[...].astype(jnp.float32)             # x already hidden-sized
        xe = xe + _gather_rows(knob_ref[...], kemb_ref)     # + self.knob_embedding(knob)
        xe = xe + _gather_rows(pos_ref[...], pe_ref)        # + self.positional_embedding(pos)
        if add_graph:
            xe = xe + g_ref[...].astype(jnp.float32)        # + graph_emb
        o_ref[...] = xe.astype(o_ref.dtype)
    return kernel


def _full_spec(shape):
    # Whole array as one VMEM block (block_shape == array dims, so no (8,128) constraint).
    return pl.BlockSpec(shape, lambda i: (0,) * len(shape))


# --------------------------------------- wrapper ----------------------------------------
@jax.jit
def knob_embedding_forward(x, knob, pos, params, graph_emb=None):
    """JAX/Pallas equivalent of KnobEmbedding.forward(x, knob, pos, graph_emb)."""
    emb = params["embedding"]        # (V, H)
    kemb = params["knob_embedding"]  # (K_pad, H)
    pe = params["pe"]                # (L_pad, H)
    H = emb.shape[1]

    use_index = (x.shape[-1] != H)   # same branch condition as the PyTorch module
    add_graph = graph_emb is not None

    lead_shape = x.shape if use_index else x.shape[:-1]
    M = int(math.prod(lead_shape))   # fold batch * seq into the matmul M dimension

    knob_in = knob.reshape(M, 1).astype(jnp.int32)
    pos_in = pos.reshape(M, 1).astype(jnp.int32)
    if use_index:
        x_in = x.reshape(M, 1).astype(jnp.int32)
    else:
        x_in = x.reshape(M, H).astype(jnp.float32)

    inputs = [x_in, knob_in, pos_in]
    specs = [_full_spec(x_in.shape), _full_spec((M, 1)), _full_spec((M, 1))]
    if use_index:
        inputs.append(emb)
        specs.append(_full_spec(emb.shape))
    inputs += [kemb, pe]
    specs += [_full_spec(kemb.shape), _full_spec(pe.shape)]
    if add_graph:
        inputs.append(graph_emb.reshape(M, H).astype(jnp.float32))
        specs.append(_full_spec((M, H)))

    out = pl.pallas_call(
        _make_knob_embedding_kernel(use_index, add_graph),
        out_shape=jax.ShapeDtypeStruct((M, H), jnp.float32),
        grid=(1,),
        in_specs=specs,
        out_specs=_full_spec((M, H)),
        compiler_params=pltpu.CompilerParams(dimension_semantics=("arbitrary",)),
    )(*inputs)
    return out.reshape(*lead_shape, H)


# ------------------------------- parameters (deterministic) -----------------------------
def make_positional_encoding(d_model, max_len, pad_to=None):
    # Exactly the PositionalEncoding buffer: pe[p, 0::2] = sin, pe[p, 1::2] = cos.
    position = jnp.arange(max_len, dtype=jnp.float32)[:, None]
    div_term = jnp.exp(jnp.arange(0, d_model, 2, dtype=jnp.float32)
                       * (-(math.log(10000.0) / d_model)))
    pe = jnp.zeros((max_len, d_model), jnp.float32)
    pe = pe.at[:, 0::2].set(jnp.sin(position * div_term))
    pe = pe.at[:, 1::2].set(jnp.cos(position * div_term))
    if pad_to is not None and pad_to > max_len:
        pe = jnp.concatenate(
            [pe, jnp.zeros((pad_to - max_len, d_model), jnp.float32)], axis=0)
    return pe


def init_params(key):
    k_emb, k_knob = jax.random.split(key, 2)
    emb = 0.02 * jax.random.normal(k_emb, (NUM_TOTAL_TOKENS, HIDDEN), jnp.float32)
    knob_rows = NUM_KNOB + 1
    kemb = jnp.zeros((8, HIDDEN), jnp.float32)          # pad 6 -> 8 rows (never indexed)
    kemb = kemb.at[:knob_rows].set(
        0.02 * jax.random.normal(k_knob, (knob_rows, HIDDEN), jnp.float32))
    pe = make_positional_encoding(HIDDEN, MAX_LEN, pad_to=128)
    return {"embedding": emb, "knob_embedding": kemb, "pe": pe}


def reference_forward(x, knob, pos, params, graph_emb=None):
    # Pure-JAX reference of KnobEmbedding.forward for correctness checking.
    emb, kemb, pe = params["embedding"], params["knob_embedding"], params["pe"]
    if x.shape[-1] != emb.shape[1]:
        xe = emb[x] + kemb[knob] + pe[pos]
    else:
        xe = x + kemb[knob] + pe[pos]
    if graph_emb is not None:
        xe = xe + graph_emb
    return xe


# ----------------------------------------- main ------------------------------------------
if __name__ == "__main__":
    key = jax.random.PRNGKey(0)
    k_x, k_knob, k_g, k_par, k_xd = jax.random.split(key, 5)
    params = init_params(k_par)

    # Branch 1: x is token ids, with graph_emb.
    x_ids = jax.random.randint(k_x, (B, S), 0, NUM_TOTAL_TOKENS, dtype=jnp.int32)
    knob = jax.random.randint(k_knob, (B, S), 0, NUM_KNOB + 1, dtype=jnp.int32)
    pos = jnp.broadcast_to(jnp.arange(S, dtype=jnp.int32), (B, S))
    graph_emb = 0.1 * jax.random.normal(k_g, (B, S, HIDDEN), jnp.float32)

    out1 = jax.block_until_ready(knob_embedding_forward(x_ids, knob, pos, params, graph_emb))
    ref1 = reference_forward(x_ids, knob, pos, params, graph_emb)
    assert out1.shape == (B, S, HIDDEN)
    assert jnp.allclose(out1, ref1, atol=1e-5, rtol=1e-5)

    # Branch 2: x already hidden-sized, no graph_emb.
    x_dense = jax.random.normal(k_xd, (B, S, HIDDEN), dtype=jnp.float32)
    out2 = jax.block_until_ready(knob_embedding_forward(x_dense, knob, pos, params))
    ref2 = reference_forward(x_dense, knob, pos, params)
    assert out2.shape == (B, S, HIDDEN)
    assert jnp.allclose(out2, ref2, atol=1e-5, rtol=1e-5)

    print("KERNEL_OK")
</pallas_src>

<mosaic_0001>
module attributes {stable_mosaic.version = 11 : i64} {
  func.func @kernel(%arg0: i32, %arg1: memref<16x1xi32, #tpu.memory_space<vmem>>, %arg2: memref<16x1xi32, #tpu.memory_space<vmem>>, %arg3: memref<16x1xi32, #tpu.memory_space<vmem>>, %arg4: memref<64x128xf32, #tpu.memory_space<vmem>>, %arg5: memref<8x128xf32, #tpu.memory_space<vmem>>, %arg6: memref<128x128xf32, #tpu.memory_space<vmem>>, %arg7: memref<16x128xf32, #tpu.memory_space<vmem>>, %arg8: memref<16x128xf32, #tpu.memory_space<vmem>>) attributes {dimension_semantics = [#tpu.dimension_semantics<arbitrary>], iteration_bounds = array<i64: 1>, scalar_prefetch = 0 : i64, scratch_operands = 0 : i64, tpu.core_type = #tpu.core_type<tc>, window_params = [{pipeline_mode = #tpu.pipeline_mode<synchronous>, transform_indices = @transform_0, window_bounds = array<i64: 16, 1>}, {pipeline_mode = #tpu.pipeline_mode<synchronous>, transform_indices = @transform_1, window_bounds = array<i64: 16, 1>}, {pipeline_mode = #tpu.pipeline_mode<synchronous>, transform_indices = @transform_2, window_bounds = array<i64: 16, 1>}, {pipeline_mode = #tpu.pipeline_mode<synchronous>, transform_indices = @transform_3, window_bounds = array<i64: 64, 128>}, {pipeline_mode = #tpu.pipeline_mode<synchronous>, transform_indices = @transform_4, window_bounds = array<i64: 8, 128>}, {pipeline_mode = #tpu.pipeline_mode<synchronous>, transform_indices = @transform_5, window_bounds = array<i64: 128, 128>}, {pipeline_mode = #tpu.pipeline_mode<synchronous>, transform_indices = @transform_6, window_bounds = array<i64: 16, 128>}, {pipeline_mode = #tpu.pipeline_mode<synchronous>, transform_indices = @transform_7, window_bounds = array<i64: 16, 128>}]} {
    %c0 = arith.constant 0 : index
    %c0_0 = arith.constant 0 : index
    %0 = vector.load %arg1[%c0, %c0_0] : memref<16x1xi32, #tpu.memory_space<vmem>>, vector<16x1xi32>
    %c0_1 = arith.constant 0 : index
    %c0_2 = arith.constant 0 : index
    %1 = vector.load %arg4[%c0_1, %c0_2] : memref<64x128xf32, #tpu.memory_space<vmem>>, vector<64x128xf32>
    %2 = tpu.iota {dimensions = array<i32: 1>} : vector<16x64xi32>
    %3 = vector.broadcast %0 : vector<16x1xi32> to vector<16x64xi32>
    %4 = arith.cmpi eq, %2, %3 : vector<16x64xi32>
    %5 = arith.extui %4 : vector<16x64xi1> to vector<16x64xi32>
    %6 = arith.sitofp %5 : vector<16x64xi32> to vector<16x64xf32>
    %cst = arith.constant dense<0.000000e+00> : vector<16x128xf32>
    %7 = tpu.matmul %6, %1, %cst {dimension_numbers = #tpu.dot_dimension_numbers<[1], [0], [0], [1], [0, 0, 1, 1], [], []>, precision = #tpu.contract_precision<fp32>} : vector<16x64xf32>, vector<64x128xf32>, vector<16x128xf32> -> vector<16x128xf32>
    %c0_3 = arith.constant 0 : index
    %c0_4 = arith.constant 0 : index
    %8 = vector.load %arg2[%c0_3, %c0_4] : memref<16x1xi32, #tpu.memory_space<vmem>>, vector<16x1xi32>
    %c0_5 = arith.constant 0 : index
    %c0_6 = arith.constant 0 : index
    %9 = vector.load %arg5[%c0_5, %c0_6] : memref<8x128xf32, #tpu.memory_space<vmem>>, vector<8x128xf32>
    %10 = tpu.iota {dimensions = array<i32: 1>} : vector<16x8xi32>
    %11 = vector.broadcast %8 : vector<16x1xi32> to vector<16x8xi32>
    %12 = arith.cmpi eq, %10, %11 : vector<16x8xi32>
    %13 = arith.extui %12 : vector<16x8xi1> to vector<16x8xi32>
    %14 = arith.sitofp %13 : vector<16x8xi32> to vector<16x8xf32>
    %cst_7 = arith.constant dense<0.000000e+00> : vector<16x128xf32>
    %15 = tpu.matmul %14, %9, %cst_7 {dimension_numbers = #tpu.dot_dimension_numbers<[1], [0], [0], [1], [0, 0, 1, 1], [], []>, precision = #tpu.contract_precision<fp32>} : vector<16x8xf32>, vector<8x128xf32>, vector<16x128xf32> -> vector<16x128xf32>
    %16 = arith.addf %7, %15 : vector<16x128xf32>
    %c0_8 = arith.constant 0 : index
    %c0_9 = arith.constant 0 : index
    %17 = vector.load %arg3[%c0_8, %c0_9] : memref<16x1xi32, #tpu.memory_space<vmem>>, vector<16x1xi32>
    %c0_10 = arith.constant 0 : index
    %c0_11 = arith.constant 0 : index
    %18 = vector.load %arg6[%c0_10, %c0_11] : memref<128x128xf32, #tpu.memory_space<vmem>>, vector<128x128xf32>
    %19 = tpu.iota {dimensions = array<i32: 1>} : vector<16x128xi32>
    %20 = vector.broadcast %17 : vector<16x1xi32> to vector<16x128xi32>
    %21 = arith.cmpi eq, %19, %20 : vector<16x128xi32>
    %22 = arith.extui %21 : vector<16x128xi1> to vector<16x128xi32>
    %23 = arith.sitofp %22 : vector<16x128xi32> to vector<16x128xf32>
    %cst_12 = arith.constant dense<0.000000e+00> : vector<16x128xf32>
    %24 = tpu.matmul %23, %18, %cst_12 {dimension_numbers = #tpu.dot_dimension_numbers<[1], [0], [0], [1], [0, 0, 1, 1], [], []>, precision = #tpu.contract_precision<fp32>} : vector<16x128xf32>, vector<128x128xf32>, vector<16x128xf32> -> vector<16x128xf32>
    %25 = arith.addf %16, %24 : vector<16x128xf32>
    %c0_13 = arith.constant 0 : index
    %c0_14 = arith.constant 0 : index
    %26 = vector.load %arg7[%c0_13, %c0_14] : memref<16x128xf32, #tpu.memory_space<vmem>>, vector<16x128xf32>
    %27 = arith.addf %25, %26 : vector<16x128xf32>
    %c0_15 = arith.constant 0 : index
    %c0_16 = arith.constant 0 : index
    %28 = vector.load %arg8[%c0_15, %c0_16] : memref<16x128xf32, #tpu.memory_space<vmem>>, vector<16x128xf32>
    tpu.vector_store %arg8[%c0_15, %c0_16], %27 {strides = array<i32>} : memref<16x128xf32, #tpu.memory_space<vmem>>, vector<16x128xf32>,
    return
  }
  func.func @transform_0(%arg0: i32) -> (i32, i32) {
    %c0_i32 = arith.constant 0 : i32
    %c0_i32_0 = arith.constant 0 : i32
    %c0_i32_1 = arith.constant 0 : i32
    return %c0_i32, %c0_i32_0 : i32, i32
  }
  func.func @transform_1(%arg0: i32) -> (i32, i32) {
    %c0_i32 = arith.constant 0 : i32
    %c0_i32_0 = arith.constant 0 : i32
    %c0_i32_1 = arith.constant 0 : i32
    return %c0_i32, %c0_i32_0 : i32, i32
  }
  func.func @transform_2(%arg0: i32) -> (i32, i32) {
    %c0_i32 = arith.constant 0 : i32
    %c0_i32_0 = arith.constant 0 : i32
    %c0_i32_1 = arith.constant 0 : i32
    return %c0_i32, %c0_i32_0 : i32, i32
  }
  func.func @transform_3(%arg0: i32) -> (i32, i32) {
    %c0_i32 = arith.constant 0 : i32
    %c0_i32_0 = arith.constant 0 : i32
    %c0_i32_1 = arith.constant 0 : i32
    return %c0_i32, %c0_i32_0 : i32, i32
  }
  func.func @transform_4(%arg0: i32) -> (i32, i32) {
    %c0_i32 = arith.constant 0 : i32
    %c0_i32_0 = arith.constant 0 : i32
    %c0_i32_1 = arith.constant 0 : i32
    return %c0_i32, %c0_i32_0 : i32, i32
  }
  func.func @transform_5(%arg0: i32) -> (i32, i32) {
    %c0_i32 = arith.constant 0 : i32
    %c0_i32_0 = arith.constant 0 : i32
    %c0_i32_1 = arith.constant 0 : i32
    return %c0_i32, %c0_i32_0 : i32, i32
  }
  func.func @transform_6(%arg0: i32) -> (i32, i32) {
    %c0_i32 = arith.constant 0 : i32
    %c0_i32_0 = arith.constant 0 : i32
    %c0_i32_1 = arith.constant 0 : i32
    return %c0_i32, %c0_i32_0 : i32, i32
  }
  func.func @transform_7(%arg0: i32) -> (i32, i32) {
    %c0_i32 = arith.constant 0 : i32
    %c0_i32_0 = arith.constant 0 : i32
    %c0_i32_1 = arith.constant 0 : i32
    return %c0_i32, %c0_i32_0 : i32, i32
  }
}

</mosaic_0001>

<llo_original>
// kernel: knob_embedding_forward.1
$region0: #{knob_embedding_forward.1}
  #allocation0 [shape = 'u32[]', space=smem, size = 0x4, offset = 0x4, fixed_abs, tag = 'smem constant byte address 0x4 - core index']
  #allocation1 [shape = 'u32[144,128]{1,0:T(1,128)}', space=vmem, size = 0x12000, scoped, tag = 'internal scratch']
  %s0 = inlined_call_operand.vmem [shape: s32[16,1], index: 0, kind: input, shape index: {}]
  %s1 = inlined_call_operand.vmem [shape: s32[16,1], index: 1, kind: input, shape index: {}]
  %s2 = inlined_call_operand.vmem [shape: s32[16,1], index: 2, kind: input, shape index: {}]
  %s3 = inlined_call_operand.vmem [shape: f32[64,128], index: 3, kind: input, shape index: {}]
  %s4 = inlined_call_operand.hbm [shape: f32[8,128], index: 4, kind: input, shape index: {}]
  %s5 = inlined_call_operand.hbm [shape: f32[128,128], index: 5, kind: input, shape index: {}]
  %s6 = inlined_call_operand.vmem [shape: f32[16,128], index: 6, kind: input, shape index: {}]
  %s7 = inlined_call_operand.hbm [shape: f32[16,128], index: 7, kind: output, shape index: {}]
  %s8 = sld [smem:[#allocation0]]
  $region46: #{knob_embedding_forward.1} parent=0
    _
  %s10 = ssub.s32 1, %s8
  %s11 = scalar_select 0, %s10, %s8
  $region1: #{knob_embedding_forward.1} parent=0
    #allocation2 [shape = 'u8[4096]{0}', space=vmem, size = 0x1000, scoped, tag = 'input window, operand 4, single buffered']
    #allocation3 [shape = 's32[1]{0}', space=sflag, size = 0x4, scoped, tag = 'scoped memory for knob_embedding_forward.1']
    #allocation4 [shape = 's32[1]{0}', space=sflag, size = 0x4, scoped, tag = 'scoped memory for knob_embedding_forward.1']
    #allocation5 [shape = 'u8[65536]{0}', space=vmem, size = 0x10000, scoped, tag = 'input window, operand 5, single buffered']
    #allocation6 [shape = 's32[1]{0}', space=sflag, size = 0x4, scoped, tag = 'scoped memory for knob_embedding_forward.1']
    #allocation7 [shape = 'u8[8192]{0}', space=vmem, size = 0x2000, scoped, tag = 'output window, operand 0, single buffered']
    %12 = vsyncpa [#allocation3], 0
    %13 = vsyncpa [#allocation6], 0
    %14 = vsyncpa [#allocation4], 0
    // Predicated region
    $region2: #{knob_embedding_forward.1} parent=1 // pred_check
      _
    $region3: #{knob_embedding_forward.1} parent=1 // pred_check_branch
      %16 = sbr.rel (0) target = $region5
    $region4: #{knob_embedding_forward.1} parent=1 // pred_region
      _
    $region5: #{knob_embedding_forward.1} parent=1 // pred_fallthru
      _
    // Predicated region
    $region6: #{knob_embedding_forward.1} parent=1 // pred_check
      _
    $region7: #{knob_embedding_forward.1} parent=1 // pred_check_branch
      %18 = sbr.rel (0) target = $region9
    $region8: #{knob_embedding_forward.1} parent=1 // pred_region
      _
    $region9: #{knob_embedding_forward.1} parent=1 // pred_fallthru
      _
    // Predicated region
    $region10: #{knob_embedding_forward.1} parent=1 // pred_check
      _
    $region11: #{knob_embedding_forward.1} parent=1 // pred_check_branch
      %20 = sbr.rel (0) target = $region13
    $region12: #{knob_embedding_forward.1} parent=1 // pred_region
      _
    $region13: #{knob_embedding_forward.1} parent=1 // pred_fallthru
      _
    // Predicated region
    $region14: #{knob_embedding_forward.1} parent=1 // pred_check
      _
    $region15: #{knob_embedding_forward.1} parent=1 // pred_check_branch
      %22 = sbr.rel (0) target = $region17
    $region16: #{knob_embedding_forward.1} parent=1 // pred_region
      _
    $region17: #{knob_embedding_forward.1} parent=1 // pred_fallthru
      _
    // Predicated region
    $region18: #{knob_embedding_forward.1} parent=1 // pred_check
      _
    $region19: #{knob_embedding_forward.1} parent=1 // pred_check_branch
      %24 = sbr.rel (0) target = $region21
    $region20: #{knob_embedding_forward.1} parent=1 // pred_region
      %s26 = ssub.s32 128, 128
      %27 = vsyncadd [#allocation3], %s26
      %s29 = sshll.u32 [#allocation2], 4
      %s30 = int_to_ptr.vmem [resolvable:$true] %s29
      %32 = dma.hbm_to_vmem [thread:$0]  %s4, 128, %s30, [#allocation3]
    $region21: #{knob_embedding_forward.1} parent=1 // pred_fallthru
      _
    // Predicated region
    $region22: #{knob_embedding_forward.1} parent=1 // pred_check
      _
    $region23: #{knob_embedding_forward.1} parent=1 // pred_check_branch
      %34 = sbr.rel (0) target = $region25
    $region24: #{knob_embedding_forward.1} parent=1 // pred_region
      %s36 = ssub.s32 2048, 2048
      %37 = vsyncadd [#allocation6], %s36
      %s38 = sshll.u32 [#allocation5], 4
      %s39 = int_to_ptr.vmem [resolvable:$true] %s38
      %44 = dma.hbm_to_vmem [thread:$0]  %s5, 2048, %s39, [#allocation6], 128, 128, 8
    $region25: #{knob_embedding_forward.1} parent=1 // pred_fallthru
      _
    // Predicated region
    $region26: #{knob_embedding_forward.1} parent=1 // pred_check
      _
    $region27: #{knob_embedding_forward.1} parent=1 // pred_check_branch
      %46 = sbr.rel (0) target = $region29
    $region28: #{knob_embedding_forward.1} parent=1 // pred_region
      _
    $region29: #{knob_embedding_forward.1} parent=1 // pred_fallthru
      _
    // Predicated region
    $region30: #{knob_embedding_forward.1} parent=1 // pred_check
      _
    $region31: #{knob_embedding_forward.1} parent=1 // pred_check_branch
      %48 = sbr.rel (0) target = $region33
    $region32: #{knob_embedding_forward.1} parent=1 // pred_region
      %49 = dma.done [#allocation3], 128
    $region33: #{knob_embedding_forward.1} parent=1 // pred_fallthru
      _
    // Predicated region
    $region34: #{knob_embedding_forward.1} parent=1 // pred_check
      _
    $region35: #{knob_embedding_forward.1} parent=1 // pred_check_branch
      %51 = sbr.rel (0) target = $region37
    $region36: #{knob_embedding_forward.1} parent=1 // pred_region
      %52 = dma.done [#allocation6], 2048
    $region37: #{knob_embedding_forward.1} parent=1 // pred_fallthru
      _
    %v53 = vld [vmem:[%s0] sm:$0xff]
    %v54 = vld [vmem:[%s0 + $0x8] sm:$0xff]
    %v55 = vld [vmem:[%s3] sm:$0xff]
    %v56 = vld [vmem:[%s3 + $0x8] sm:$0xff]
    %v57 = vld [vmem:[%s3 + $0x10] sm:$0xff]
    %v58 = vld [vmem:[%s3 + $0x18] sm:$0xff]
    %v59 = vld [vmem:[%s3 + $0x20] sm:$0xff]
    %v60 = vld [vmem:[%s3 + $0x28] sm:$0xff]
    %v61 = vld [vmem:[%s3 + $0x30] sm:$0xff]
    %v62 = vld [vmem:[%s3 + $0x38] sm:$0xff]
    %v63 = vlaneseq
    %v64 = vand.u32 %v63, 127
    %65 = vset.pattern.permute.xlu0 0
    %66 = vperm.xlu0 %65, %v53
    %v67 = vpop.permute.xlu0 %66
    %68 = vset.pattern.permute.xlu0 0
    %69 = vperm.xlu0 %68, %v54
    %v70 = vpop.permute.xlu0 %69
    %vm71 = vcmp.eq.s32.totalorder %v64, %v67
    %vm72 = vcmp.eq.s32.totalorder %v64, %v70
    %v73 = vsel %vm71, 1, 0
    %v74 = vsel %vm72, 1, 0
    %v75 = vcvt.s32.f32 %v73
    %v76 = vcvt.s32.f32 %v74
    %v77 = vld [vmem:[%s1] sm:$0xff]
    %v78 = vld [vmem:[%s1 + $0x8] sm:$0xff]
    %v79 = vld [vmem:[#allocation2] sm:$0xff]
    %80 = vset.pattern.permute.xlu0 0
    %81 = vperm.xlu0 %80, %v77
    %v82 = vpop.permute.xlu0 %81
    %83 = vset.pattern.permute.xlu0 0
    %84 = vperm.xlu0 %83, %v78
    %v85 = vpop.permute.xlu0 %84
    %vm86 = vcmp.eq.s32.totalorder %v64, %v82
    %vm87 = vcmp.eq.s32.totalorder %v64, %v85
    %v88 = vsel %vm86, 1, 0
    %v89 = vsel %vm87, 1, 0
    %v90 = vcvt.s32.f32 %v88
    %v91 = vcvt.s32.f32 %v89
    %vm92 = vcmask 64512
    %v94 = vsel %vm92, %v90, 0
    %v97 = vsel %vm92, %v91, 0
    %99 = vmatprep.subr.mxu0 0.0
    %v100 = vand.u32 %v79, 4294901760
    %101 = vmatpush1.msra.mxu0 %v100
    %102 = vmatprep.subr.mxu0 0.0
    %103 = vmatpush1.msra.mxu0 0.0
    %104 = vmatprep.subr.mxu0 0.0
    %105 = vmatpush1.msra.mxu0 0.0
    %106 = vmatprep.subr.mxu0 0.0
    %107 = vmatpush1.msra.mxu0 0.0
    %108 = vmatprep.subr.mxu0 0.0
    %109 = vmatpush1.msra.mxu0 0.0
    %110 = vmatprep.subr.mxu0 0.0
    %111 = vmatpush1.msra.mxu0 0.0
    %112 = vmatprep.subr.mxu0 0.0
    %113 = vmatpush1.msra.mxu0 0.0
    %114 = vmatprep.subr.mxu0 0.0
    %115 = vmatpush1.msra.mxu0 0.0
    %116 = vmatprep.subr.mxu0 0.0
    %117 = vmatpush1.msra.mxu0 0.0
    %118 = vmatprep.subr.mxu0 0.0
    %119 = vmatpush1.msra.mxu0 0.0
    %120 = vmatprep.subr.mxu0 0.0
    %121 = vmatpush1.msra.mxu0 0.0
    %122 = vmatprep.subr.mxu0 0.0
    %123 = vmatpush1.msra.mxu0 0.0
    %124 = vmatprep.subr.mxu0 0.0
    %125 = vmatpush1.msra.mxu0 0.0
    %126 = vmatprep.subr.mxu0 0.0
    %127 = vmatpush1.msra.mxu0 0.0
    %128 = vmatprep.subr.mxu0 0.0
    %129 = vmatpush1.msra.mxu0 0.0
    %130 = vmatprep.subr.mxu0 0.0
    %131 = vmatpush1.msra.mxu0 0.0
    %132 = vmatprep.subr.mxu0 0.0
    %133 = vmatpush1.msra.mxu0 0.0
    %134 = vmatprep.subr.mxu0 0.0
    %135 = vmatpush1.msra.mxu0 0.0
    %136 = vmatprep.subr.mxu0 0.0
    %137 = vmatpush1.msra.mxu0 0.0
    %138 = vmatprep.subr.mxu0 0.0
    %139 = vmatpush1.msra.mxu0 0.0
    %140 = vmatprep.subr.mxu0 0.0
    %141 = vmatpush1.msra.mxu0 0.0
    %142 = vmatprep.subr.mxu0 0.0
    %143 = vmatpush1.msra.mxu0 0.0
    %144 = vmatprep.subr.mxu0 0.0
    %145 = vmatpush1.msra.mxu0 0.0
    %146 = vmatprep.subr.mxu0 0.0
    %147 = vmatpush1.msra.mxu0 0.0
    %148 = vmatprep.subr.mxu0 0.0
    %149 = vmatpush1.msra.mxu0 0.0
    %150 = vmatprep.subr.mxu0 0.0
    %151 = vmatpush1.msra.mxu0 0.0
    %152 = vmatprep.subr.mxu0 0.0
    %153 = vmatpush1.msra.mxu0 0.0
    %154 = vmatprep.subr.mxu0 0.0
    %155 = vmatpush1.msra.mxu0 0.0
    %156 = vmatprep.subr.mxu0 0.0
    %157 = vmatpush1.msra.mxu0 0.0
    %158 = vmatprep.subr.mxu0 0.0
    %159 = vmatpush1.msra.mxu0 0.0
    %160 = vmatprep.subr.mxu0 0.0
    %161 = vmatpush1.msra.mxu0 0.0
    %162 = vmatprep.subr.mxu0 0.0
    %163 = vmatpush1.msra.mxu0 0.0
    %164 = vmatprep.mubr.f32.mxu0 0.0
    %v165 = vand.u32 %v94, 4294901760
    %v166 = vsub.f32 %v94, %v165
    %v167 = vand.u32 %v166, 4294901760
    %v168 = vsub.f32 %v166, %v167
    %v169 = vand.u32 %v168, 4294901760
    %170 = vmatmul.mubr.f32.gmra.mrb[0].mxu0 %v169
    %v171 = vpop.f32.mrb[0].mxu0
    %v172 = vadd.f32 0.0, %v171
    %v173 = vpop.f32.mrb[0].mxu0
    %174 = vmatprep.mubr.f32.mxu0 0.0
    %v175 = vand.u32 %v97, 4294901760
    %v176 = vsub.f32 %v97, %v175
    %v177 = vand.u32 %v176, 4294901760
    %v178 = vsub.f32 %v176, %v177
    %v179 = vand.u32 %v178, 4294901760
    %180 = vmatmul.mubr.f32.gmra.mrb[0].mxu0 %v179
    %v181 = vpop.f32.mrb[0].mxu0
    %v182 = vadd.f32 0.0, %v181
    %v183 = vpop.f32.mrb[0].mxu0
    %184 = vdwg.mxu0
    %185 = vmatprep.subr.mxu0 0.0
    %v186 = vand.u32 %v79, 4294901760
    %v187 = vsub.f32 %v79, %v186
    %v188 = vand.u32 %v187, 4294901760
    %v189 = vsub.f32 %v187, %v188
    %v190 = vand.u32 %v189, 4294901760
    %191 = vmatpush1.msra.mxu0 %v190
    %192 = vmatprep.subr.mxu0 0.0
    %193 = vmatpush1.msra.mxu0 0.0
    %194 = vmatprep.subr.mxu0 0.0
    %195 = vmatpush1.msra.mxu0 0.0
    %196 = vmatprep.subr.mxu0 0.0
    %197 = vmatpush1.msra.mxu0 0.0
    %198 = vmatprep.subr.mxu0 0.0
    %199 = vmatpush1.msra.mxu0 0.0
    %200 = vmatprep.subr.mxu0 0.0
    %201 = vmatpush1.msra.mxu0 0.0
    %202 = vmatprep.subr.mxu0 0.0
    %203 = vmatpush1.msra.mxu0 0.0
    %204 = vmatprep.subr.mxu0 0.0
    %205 = vmatpush1.msra.mxu0 0.0
    %206 = vmatprep.subr.mxu0 0.0
    %207 = vmatpush1.msra.mxu0 0.0
    %208 = vmatprep.subr.mxu0 0.0
    %209 = vmatpush1.msra.mxu0 0.0
    %210 = vmatprep.subr.mxu0 0.0
    %211 = vmatpush1.msra.mxu0 0.0
    %212 = vmatprep.subr.mxu0 0.0
    %213 = vmatpush1.msra.mxu0 0.0
    %214 = vmatprep.subr.mxu0 0.0
    %215 = vmatpush1.msra.mxu0 0.0
    %216 = vmatprep.subr.mxu0 0.0
    %217 = vmatpush1.msra.mxu0 0.0
    %218 = vmatprep.subr.mxu0 0.0
    %219 = vmatpush1.msra.mxu0 0.0
    %220 = vmatprep.subr.mxu0 0.0
    %221 = vmatpush1.msra.mxu0 0.0
    %222 = vmatprep.subr.mxu0 0.0
    %223 = vmatpush1.msra.mxu0 0.0
    %224 = vmatprep.subr.mxu0 0.0
    %225 = vmatpush1.msra.mxu0 0.0
    %226 = vmatprep.subr.mxu0 0.0
    %227 = vmatpush1.msra.mxu0 0.0
    %228 = vmatprep.subr.mxu0 0.0
    %229 = vmatpush1.msra.mxu0 0.0
    %230 = vmatprep.subr.mxu0 0.0
    %231 = vmatpush1.msra.mxu0 0.0
    %232 = vmatprep.subr.mxu0 0.0
    %233 = vmatpush1.msra.mxu0 0.0
    %234 = vmatprep.subr.mxu0 0.0
    %235 = vmatpush1.msra.mxu0 0.0
    %236 = vmatprep.subr.mxu0 0.0
    %237 = vmatpush1.msra.mxu0 0.0
    %238 = vmatprep.subr.mxu0 0.0
    %239 = vmatpush1.msra.mxu0 0.0
    %240 = vmatprep.subr.mxu0 0.0
    %241 = vmatpush1.msra.mxu0 0.0
    %242 = vmatprep.subr.mxu0 0.0
    %243 = vmatpush1.msra.mxu0 0.0
    %244 = vmatprep.subr.mxu0 0.0
    %245 = vmatpush1.msra.mxu0 0.0
    %246 = vmatprep.subr.mxu0 0.0
    %247 = vmatpush1.msra.mxu0 0.0
    %248 = vmatprep.subr.mxu0 0.0
    %249 = vmatpush1.msra.mxu0 0.0
    %250 = vmatprep.subr.mxu0 0.0
    %251 = vmatpush1.msra.mxu0 0.0
    %252 = vmatprep.subr.mxu0 0.0
    %253 = vmatpush1.msra.mxu0 0.0
    %254 = vmatprep.mubr.f32.mxu0 0.0
    %v255 = vand.u32 %v94, 4294901760
    %256 = vmatmul.mubr.f32.gmra.mrb[0].mxu0 %v255
    %v257 = vpop.f32.mrb[0].mxu0
    %v258 = vadd.f32 %v172, %v257
    %v259 = vpop.f32.mrb[0].mxu0
    %260 = vmatprep.mubr.f32.mxu0 0.0
    %v261 = vand.u32 %v97, 4294901760
    %262 = vmatmul.mubr.f32.gmra.mrb[0].mxu0 %v261
    %v263 = vpop.f32.mrb[0].mxu0
    %v264 = vadd.f32 %v182, %v263
    %v265 = vpop.f32.mrb[0].mxu0
    %266 = vdwg.mxu0
    %267 = vmatprep.subr.mxu0 0.0
    %v268 = vand.u32 %v79, 4294901760
    %v269 = vsub.f32 %v79, %v268
    %270 = vmatpush1.msra.mxu0 %v269
    %271 = vmatprep.subr.mxu0 0.0
    %272 = vmatpush1.msra.mxu0 0.0
    %273 = vmatprep.subr.mxu0 0.0
    %274 = vmatpush1.msra.mxu0 0.0
    %275 = vmatprep.subr.mxu0 0.0
    %276 = vmatpush1.msra.mxu0 0.0
    %277 = vmatprep.subr.mxu0 0.0
    %278 = vmatpush1.msra.mxu0 0.0
    %279 = vmatprep.subr.mxu0 0.0
    %280 = vmatpush1.msra.mxu0 0.0
    %281 = vmatprep.subr.mxu0 0.0
    %282 = vmatpush1.msra.mxu0 0.0
    %283 = vmatprep.subr.mxu0 0.0
    %284 = vmatpush1.msra.mxu0 0.0
    %285 = vmatprep.subr.mxu0 0.0
    %286 = vmatpush1.msra.mxu0 0.0
    %287 = vmatprep.subr.mxu0 0.0
    %288 = vmatpush1.msra.mxu0 0.0
    %289 = vmatprep.subr.mxu0 0.0
    %290 = vmatpush1.msra.mxu0 0.0
    %291 = vmatprep.subr.mxu0 0.0
    %292 = vmatpush1.msra.mxu0 0.0
    %293 = vmatprep.subr.mxu0 0.0
    %294 = vmatpush1.msra.mxu0 0.0
    %295 = vmatprep.subr.mxu0 0.0
    %296 = vmatpush1.msra.mxu0 0.0
    %297 = vmatprep.subr.mxu0 0.0
    %298 = vmatpush1.msra.mxu0 0.0
    %299 = vmatprep.subr.mxu0 0.0
    %300 = vmatpush1.msra.mxu0 0.0
    %301 = vmatprep.subr.mxu0 0.0
    %302 = vmatpush1.msra.mxu0 0.0
    %303 = vmatprep.subr.mxu0 0.0
    %304 = vmatpush1.msra.mxu0 0.0
    %305 = vmatprep.subr.mxu0 0.0
    %306 = vmatpush1.msra.mxu0 0.0
    %307 = vmatprep.subr.mxu0 0.0
    %308 = vmatpush1.msra.mxu0 0.0
    %309 = vmatprep.subr.mxu0 0.0
    %310 = vmatpush1.msra.mxu0 0.0
    %311 = vmatprep.subr.mxu0 0.0
    %312 = vmatpush1.msra.mxu0 0.0
    %313 = vmatprep.subr.mxu0 0.0
    %314 = vmatpush1.msra.mxu0 0.0
    %315 = vmatprep.subr.mxu0 0.0
    %316 = vmatpush1.msra.mxu0 0.0
    %317 = vmatprep.subr.mxu0 0.0
    %318 = vmatpush1.msra.mxu0 0.0
    %319 = vmatprep.subr.mxu0 0.0
    %320 = vmatpush1.msra.mxu0 0.0
    %321 = vmatprep.subr.mxu0 0.0
    %322 = vmatpush1.msra.mxu0 0.0
    %323 = vmatprep.subr.mxu0 0.0
    %324 = vmatpush1.msra.mxu0 0.0
    %325 = vmatprep.subr.mxu0 0.0
    %326 = vmatpush1.msra.mxu0 0.0
    %327 = vmatprep.subr.mxu0 0.0
    %328 = vmatpush1.msra.mxu0 0.0
    %329 = vmatprep.subr.mxu0 0.0
    %330 = vmatpush1.msra.mxu0 0.0
    %331 = vmatprep.subr.mxu0 0.0
    %332 = vmatpush1.msra.mxu0 0.0
    %333 = vmatprep.mubr.f32.mxu0 0.0
    %v334 = vand.u32 %v94, 4294901760
    %v335 = vsub.f32 %v94, %v334
    %336 = vmatmul.mubr.f32.gmra.mrb[0].mxu0 %v335
    %v337 = vpop.f32.mrb[0].mxu0
    %v338 = vadd.f32 %v258, %v337
    %v339 = vpop.f32.mrb[0].mxu0
    %340 = vmatprep.mubr.f32.mxu0 0.0
    %v341 = vand.u32 %v97, 4294901760
    %v342 = vsub.f32 %v97, %v341
    %343 = vmatmul.mubr.f32.gmra.mrb[0].mxu0 %v342
    %v344 = vpop.f32.mrb[0].mxu0
    %v345 = vadd.f32 %v264, %v344
    %v346 = vpop.f32.mrb[0].mxu0
    %347 = vdwg.mxu0
    %348 = vmatprep.subr.mxu0 0.0
    %v349 = vand.u32 %v79, 4294901760
    %350 = vmatpush1.msra.mxu0 %v349
    %351 = vmatprep.subr.mxu0 0.0
    %352 = vmatpush1.msra.mxu0 0.0
    %353 = vmatprep.subr.mxu0 0.0
    %354 = vmatpush1.msra.mxu0 0.0
    %355 = vmatprep.subr.mxu0 0.0
    %356 = vmatpush1.msra.mxu0 0.0
    %357 = vmatprep.subr.mxu0 0.0
    %358 = vmatpush1.msra.mxu0 0.0
    %359 = vmatprep.subr.mxu0 0.0
    %360 = vmatpush1.msra.mxu0 0.0
    %361 = vmatprep.subr.mxu0 0.0
    %362 = vmatpush1.msra.mxu0 0.0
    %363 = vmatprep.subr.mxu0 0.0
    %364 = vmatpush1.msra.mxu0 0.0
    %365 = vmatprep.subr.mxu0 0.0
    %366 = vmatpush1.msra.mxu0 0.0
    %367 = vmatprep.subr.mxu0 0.0
    %368 = vmatpush1.msra.mxu0 0.0
    %369 = vmatprep.subr.mxu0 0.0
    %370 = vmatpush1.msra.mxu0 0.0
    %371 = vmatprep.subr.mxu0 0.0
    %372 = vmatpush1.msra.mxu0 0.0
    %373 = vmatprep.subr.mxu0 0.0
    %374 = vmatpush1.msra.mxu0 0.0
    %375 = vmatprep.subr.mxu0 0.0
    %376 = vmatpush1.msra.mxu0 0.0
    %377 = vmatprep.subr.mxu0 0.0
    %378 = vmatpush1.msra.mxu0 0.0
    %379 = vmatprep.subr.mxu0 0.0
    %380 = vmatpush1.msra.mxu0 0.0
    %381 = vmatprep.subr.mxu0 0.0
    %382 = vmatpush1.msra.mxu0 0.0
    %383 = vmatprep.subr.mxu0 0.0
    %384 = vmatpush1.msra.mxu0 0.0
    %385 = vmatprep.subr.mxu0 0.0
    %386 = vmatpush1.msra.mxu0 0.0
    %387 = vmatprep.subr.mxu0 0.0
    %388 = vmatpush1.msra.mxu0 0.0
    %389 = vmatprep.subr.mxu0 0.0
    %390 = vmatpush1.msra.mxu0 0.0
    %391 = vmatprep.subr.mxu0 0.0
    %392 = vmatpush1.msra.mxu0 0.0
    %393 = vmatprep.subr.mxu0 0.0
    %394 = vmatpush1.msra.mxu0 0.0
    %395 = vmatprep.subr.mxu0 0.0
    %396 = vmatpush1.msra.mxu0 0.0
    %397 = vmatprep.subr.mxu0 0.0
    %398 = vmatpush1.msra.mxu0 0.0
    %399 = vmatprep.subr.mxu0 0.0
    %400 = vmatpush1.msra.mxu0 0.0
    %401 = vmatprep.subr.mxu0 0.0
    %402 = vmatpush1.msra.mxu0 0.0
    %403 = vmatprep.subr.mxu0 0.0
    %404 = vmatpush1.msra.mxu0 0.0
    %405 = vmatprep.subr.mxu0 0.0
    %406 = vmatpush1.msra.mxu0 0.0
    %407 = vmatprep.subr.mxu0 0.0
    %408 = vmatpush1.msra.mxu0 0.0
    %409 = vmatprep.subr.mxu0 0.0
    %410 = vmatpush1.msra.mxu0 0.0
    %411 = vmatprep.subr.mxu0 0.0
    %412 = vmatpush1.msra.mxu0 0.0
    %413 = vmatprep.mubr.f32.mxu0 0.0
    %v414 = vand.u32 %v94, 4294901760
    %v415 = vsub.f32 %v94, %v414
    %v416 = vand.u32 %v415, 4294901760
    %417 = vmatmul.mubr.f32.gmra.mrb[0].mxu0 %v416
    %v418 = vpop.f32.mrb[0].mxu0
    %v419 = vadd.f32 %v338, %v418
    %v420 = vpop.f32.mrb[0].mxu0
    %421 = vmatprep.mubr.f32.mxu0 0.0
    %v422 = vand.u32 %v97, 4294901760
    %v423 = vsub.f32 %v97, %v422
    %v424 = vand.u32 %v423, 4294901760
    %425 = vmatmul.mubr.f32.gmra.mrb[0].mxu0 %v424
    %v426 = vpop.f32.mrb[0].mxu0
    %v427 = vadd.f32 %v345, %v426
    %v428 = vpop.f32.mrb[0].mxu0
    %429 = vdwg.mxu0
    %430 = vmatprep.subr.mxu0 0.0
    %v431 = vand.u32 %v79, 4294901760
    %v432 = vsub.f32 %v79, %v431
    %v433 = vand.u32 %v432, 4294901760
    %434 = vmatpush1.msra.mxu0 %v433
    %435 = vmatprep.subr.mxu0 0.0
    %436 = vmatpush1.msra.mxu0 0.0
    %437 = vmatprep.subr.mxu0 0.0
    %438 = vmatpush1.msra.mxu0 0.0
    %439 = vmatprep.subr.mxu0 0.0
    %440 = vmatpush1.msra.mxu0 0.0
    %441 = vmatprep.subr.mxu0 0.0
    %442 = vmatpush1.msra.mxu0 0.0
    %443 = vmatprep.subr.mxu0 0.0
    %444 = vmatpush1.msra.mxu0 0.0
    %445 = vmatprep.subr.mxu0 0.0
    %446 = vmatpush1.msra.mxu0 0.0
    %447 = vmatprep.subr.mxu0 0.0
    %448 = vmatpush1.msra.mxu0 0.0
    %449 = vmatprep.subr.mxu0 0.0
    %450 = vmatpush1.msra.mxu0 0.0
    %451 = vmatprep.subr.mxu0 0.0
    %452 = vmatpush1.msra.mxu0 0.0
    %453 = vmatprep.subr.mxu0 0.0
    %454 = vmatpush1.msra.mxu0 0.0
    %455 = vmatprep.subr.mxu0 0.0
    %456 = vmatpush1.msra.mxu0 0.0
    %457 = vmatprep.subr.mxu0 0.0
    %458 = vmatpush1.msra.mxu0 0.0
    %459 = vmatprep.subr.mxu0 0.0
    %460 = vmatpush1.msra.mxu0 0.0
    %461 = vmatprep.subr.mxu0 0.0
    %462 = vmatpush1.msra.mxu0 0.0
    %463 = vmatprep.subr.mxu0 0.0
    %464 = vmatpush1.msra.mxu0 0.0
    %465 = vmatprep.subr.mxu0 0.0
    %466 = vmatpush1.msra.mxu0 0.0
    %467 = vmatprep.subr.mxu0 0.0
    %468 = vmatpush1.msra.mxu0 0.0
    %469 = vmatprep.subr.mxu0 0.0
    %470 = vmatpush1.msra.mxu0 0.0
    %471 = vmatprep.subr.mxu0 0.0
    %472 = vmatpush1.msra.mxu0 0.0
    %473 = vmatprep.subr.mxu0 0.0
    %474 = vmatpush1.msra.mxu0 0.0
    %475 = vmatprep.subr.mxu0 0.0
    %476 = vmatpush1.msra.mxu0 0.0
    %477 = vmatprep.subr.mxu0 0.0
    %478 = vmatpush1.msra.mxu0 0.0
    %479 = vmatprep.subr.mxu0 0.0
    %480 = vmatpush1.msra.mxu0 0.0
    %481 = vmatprep.subr.mxu0 0.0
    %482 = vmatpush1.msra.mxu0 0.0
    %483 = vmatprep.subr.mxu0 0.0
    %484 = vmatpush1.msra.mxu0 0.0
    %485 = vmatprep.subr.mxu0 0.0
    %486 = vmatpush1.msra.mxu0 0.0
    %487 = vmatprep.subr.mxu0 0.0
    %488 = vmatpush1.msra.mxu0 0.0
    %489 = vmatprep.subr.mxu0 0.0
    %490 = vmatpush1.msra.mxu0 0.0
    %491 = vmatprep.subr.mxu0 0.0
    %492 = vmatpush1.msra.mxu0 0.0
    %493 = vmatprep.subr.mxu0 0.0
    %494 = vmatpush1.msra.mxu0 0.0
    %495 = vmatprep.subr.mxu0 0.0
    %496 = vmatpush1.msra.mxu0 0.0
    %497 = vmatprep.mubr.f32.mxu0 0.0
    %v498 = vand.u32 %v94, 4294901760
    %499 = vmatmul.mubr.f32.gmra.mrb[0].mxu0 %v498
    %v500 = vpop.f32.mrb[0].mxu0
    %v501 = vadd.f32 %v419, %v500
    %v502 = vpop.f32.mrb[0].mxu0
    %503 = vmatprep.mubr.f32.mxu0 0.0
    %v504 = vand.u32 %v97, 4294901760
    %505 = vmatmul.mubr.f32.gmra.mrb[0].mxu0 %v504
    %v506 = vpop.f32.mrb[0].mxu0
    %v507 = vadd.f32 %v427, %v506
    %v508 = vpop.f32.mrb[0].mxu0
    %509 = vdwg.mxu0
    %510 = vmatprep.subr.mxu0 0.0
    %v511 = vand.u32 %v79, 4294901760
    %512 = vmatpush1.msra.mxu0 %v511
    %513 = vmatprep.subr.mxu0 0.0
    %514 = vmatpush1.msra.mxu0 0.0
    %515 = vmatprep.subr.mxu0 0.0
    %516 = vmatpush1.msra.mxu0 0.0
    %517 = vmatprep.subr.mxu0 0.0
    %518 = vmatpush1.msra.mxu0 0.0
    %519 = vmatprep.subr.mxu0 0.0
    %520 = vmatpush1.msra.mxu0 0.0
    %521 = vmatprep.subr.mxu0 0.0
    %522 = vmatpush1.msra.mxu0 0.0
    %523 = vmatprep.subr.mxu0 0.0
    %524 = vmatpush1.msra.mxu0 0.0
    %525 = vmatprep.subr.mxu0 0.0
    %526 = vmatpush1.msra.mxu0 0.0
    %527 = vmatprep.subr.mxu0 0.0
    %528 = vmatpush1.msra.mxu0 0.0
    %529 = vmatprep.subr.mxu0 0.0
    %530 = vmatpush1.msra.mxu0 0.0
    %531 = vmatprep.subr.mxu0 0.0
    %532 = vmatpush1.msra.mxu0 0.0
    %533 = vmatprep.subr.mxu0 0.0
    %534 = vmatpush1.msra.mxu0 0.0
    %535 = vmatprep.subr.mxu0 0.0
    %536 = vmatpush1.msra.mxu0 0.0
    %537 = vmatprep.subr.mxu0 0.0
    %538 = vmatpush1.msra.mxu0 0.0
    %539 = vmatprep.subr.mxu0 0.0
    %540 = vmatpush1.msra.mxu0 0.0
    %541 = vmatprep.subr.mxu0 0.0
    %542 = vmatpush1.msra.mxu0 0.0
    %543 = vmatprep.subr.mxu0 0.0
    %544 = vmatpush1.msra.mxu0 0.0
    %545 = vmatprep.subr.mxu0 0.0
    %546 = vmatpush1.msra.mxu0 0.0
    %547 = vmatprep.subr.mxu0 0.0
    %548 = vmatpush1.msra.mxu0 0.0
    %549 = vmatprep.subr.mxu0 0.0
    %550 = vmatpush1.msra.mxu0 0.0
    %551 = vmatprep.subr.mxu0 0.0
    %552 = vmatpush1.msra.mxu0 0.0
    %553 = vmatprep.subr.mxu0 0.0
    %554 = vmatpush1.msra.mxu0 0.0
    %555 = vmatprep.subr.mxu0 0.0
    %556 = vmatpush1.msra.mxu0 0.0
    %557 = vmatprep.subr.mxu0 0.0
    %558 = vmatpush1.msra.mxu0 0.0
    %559 = vmatprep.subr.mxu0 0.0
    %560 = vmatpush1.msra.mxu0 0.0
    %561 = vmatprep.subr.mxu0 0.0
    %562 = vmatpush1.msra.mxu0 0.0
    %563 = vmatprep.subr.mxu0 0.0
    %564 = vmatpush1.msra.mxu0 0.0
    %565 = vmatprep.subr.mxu0 0.0
    %566 = vmatpush1.msra.mxu0 0.0
    %567 = vmatprep.subr.mxu0 0.0
    %568 = vmatpush1.msra.mxu0 0.0
    %569 = vmatprep.subr.mxu0 0.0
    %570 = vmatpush1.msra.mxu0 0.0
    %571 = vmatprep.subr.mxu0 0.0
    %572 = vmatpush1.msra.mxu0 0.0
    %573 = vmatprep.subr.mxu0 0.0
    %574 = vmatpush1.msra.mxu0 0.0
    %575 = vmatprep.mubr.f32.mxu0 0.0
    %v576 = vand.u32 %v94, 4294901760
    %577 = vmatmul.mubr.f32.gmra.mrb[0].mxu0 %v576
    %v578 = vpop.f32.mrb[0].mxu0
    %v579 = vadd.f32 %v501, %v578
    %v580 = vpop.f32.mrb[0].mxu0
    %581 = vmatprep.mubr.f32.mxu0 0.0
    %v582 = vand.u32 %v97, 4294901760
    %583 = vmatmul.mubr.f32.gmra.mrb[0].mxu0 %v582
    %v584 = vpop.f32.mrb[0].mxu0
    %v585 = vadd.f32 %v507, %v584
    %v586 = vpop.f32.mrb[0].mxu0
    %587 = vdwg.mxu0
    %vm588 = vcmask 523264
    %v590 = vsel %vm588, %v75, 0
    %v593 = vsel %vm588, %v76, 0
    %595 = vmatprep.subr.mxu0 0.0
    %v596 = vand.u32 %v55, 4294901760
    %597 = vmatpush1.msra.mxu0 %v596
    %598 = vmatprep.subr.mxu0 0.0
    %v599 = vand.u32 %v56, 4294901760
    %600 = vmatpush1.msra.mxu0 %v599
    %601 = vmatprep.subr.mxu0 0.0
    %v602 = vand.u32 %v57, 4294901760
    %603 = vmatpush1.msra.mxu0 %v602
    %604 = vmatprep.subr.mxu0 0.0
    %v605 = vand.u32 %v58, 4294901760
    %606 = vmatpush1.msra.mxu0 %v605
    %607 = vmatprep.subr.mxu0 0.0
    %v608 = vand.u32 %v59, 4294901760
    %609 = vmatpush1.msra.mxu0 %v608
    %610 = vmatprep.subr.mxu0 0.0
    %v611 = vand.u32 %v60, 4294901760
    %612 = vmatpush1.msra.mxu0 %v611
    %613 = vmatprep.subr.mxu0 0.0
    %v614 = vand.u32 %v61, 4294901760
    %615 = vmatpush1.msra.mxu0 %v614
    %616 = vmatprep.subr.mxu0 0.0
    %v617 = vand.u32 %v62, 4294901760
    %618 = vmatpush1.msra.mxu0 %v617
    %619 = vmatprep.subr.mxu0 0.0
    %620 = vmatpush1.msra.mxu0 0.0
    %621 = vmatprep.subr.mxu0 0.0
    %622 = vmatpush1.msra.mxu0 0.0
    %623 = vmatprep.subr.mxu0 0.0
    %624 = vmatpush1.msra.mxu0 0.0
    %625 = vmatprep.subr.mxu0 0.0
    %626 = vmatpush1.msra.mxu0 0.0
    %627 = vmatprep.subr.mxu0 0.0
    %628 = vmatpush1.msra.mxu0 0.0
    %629 = vmatprep.subr.mxu0 0.0
    %630 = vmatpush1.msra.mxu0 0.0
    %631 = vmatprep.subr.mxu0 0.0
    %632 = vmatpush1.msra.mxu0 0.0
    %633 = vmatprep.subr.mxu0 0.0
    %634 = vmatpush1.msra.mxu0 0.0
    %635 = vmatprep.subr.mxu0 0.0
    %636 = vmatpush1.msra.mxu0 0.0
    %637 = vmatprep.subr.mxu0 0.0
    %638 = vmatpush1.msra.mxu0 0.0
    %639 = vmatprep.subr.mxu0 0.0
    %640 = vmatpush1.msra.mxu0 0.0
    %641 = vmatprep.subr.mxu0 0.0
    %642 = vmatpush1.msra.mxu0 0.0
    %643 = vmatprep.subr.mxu0 0.0
    %644 = vmatpush1.msra.mxu0 0.0
    %645 = vmatprep.subr.mxu0 0.0
    %646 = vmatpush1.msra.mxu0 0.0
    %647 = vmatprep.subr.mxu0 0.0
    %648 = vmatpush1.msra.mxu0 0.0
    %649 = vmatprep.subr.mxu0 0.0
    %650 = vmatpush1.msra.mxu0 0.0
    %651 = vmatprep.subr.mxu0 0.0
    %652 = vmatpush1.msra.mxu0 0.0
    %653 = vmatprep.subr.mxu0 0.0
    %654 = vmatpush1.msra.mxu0 0.0
    %655 = vmatprep.subr.mxu0 0.0
    %656 = vmatpush1.msra.mxu0 0.0
    %657 = vmatprep.subr.mxu0 0.0
    %658 = vmatpush1.msra.mxu0 0.0
    %659 = vmatprep.subr.mxu0 0.0
    %660 = vmatpush1.msra.mxu0 0.0
    %661 = vmatprep.subr.mxu0 0.0
    %662 = vmatpush1.msra.mxu0 0.0
    %663 = vmatprep.subr.mxu0 0.0
    %664 = vmatpush1.msra.mxu0 0.0
    %665 = vmatprep.subr.mxu0 0.0
    %666 = vmatpush1.msra.mxu0 0.0
    %667 = vmatprep.mubr.f32.mxu0 0.0
    %v668 = vand.u32 %v590, 4294901760
    %v669 = vsub.f32 %v590, %v668
    %v670 = vand.u32 %v669, 4294901760
    %v671 = vsub.f32 %v669, %v670
    %v672 = vand.u32 %v671, 4294901760
    %673 = vmatmul.mubr.f32.gmra.mrb[0].mxu0 %v672
    %v674 = vpop.f32.mrb[0].mxu0
    %v675 = vadd.f32 %v579, %v674
    %v676 = vpop.f32.mrb[0].mxu0
    %677 = vmatprep.mubr.f32.mxu0 0.0
    %v678 = vand.u32 %v593, 4294901760
    %v679 = vsub.f32 %v593, %v678
    %v680 = vand.u32 %v679, 4294901760
    %v681 = vsub.f32 %v679, %v680
    %v682 = vand.u32 %v681, 4294901760
    %683 = vmatmul.mubr.f32.gmra.mrb[0].mxu0 %v682
    %v684 = vpop.f32.mrb[0].mxu0
    %v685 = vadd.f32 %v585, %v684
    %v686 = vpop.f32.mrb[0].mxu0
    %687 = vdwg.mxu0
    %688 = vmatprep.subr.mxu0 0.0
    %v689 = vand.u32 %v55, 4294901760
    %v690 = vsub.f32 %v55, %v689
    %v691 = vand.u32 %v690, 4294901760
    %v692 = vsub.f32 %v690, %v691
    %v693 = vand.u32 %v692, 4294901760
    %694 = vmatpush1.msra.mxu0 %v693
    %695 = vmatprep.subr.mxu0 0.0
    %v696 = vand.u32 %v56, 4294901760
    %v697 = vsub.f32 %v56, %v696
    %v698 = vand.u32 %v697, 4294901760
    %v699 = vsub.f32 %v697, %v698
    %v700 = vand.u32 %v699, 4294901760
    %701 = vmatpush1.msra.mxu0 %v700
    %702 = vmatprep.subr.mxu0 0.0
    %v703 = vand.u32 %v57, 4294901760
    %v704 = vsub.f32 %v57, %v703
    %v705 = vand.u32 %v704, 4294901760
    %v706 = vsub.f32 %v704, %v705
    %v707 = vand.u32 %v706, 4294901760
    %708 = vmatpush1.msra.mxu0 %v707
    %709 = vmatprep.subr.mxu0 0.0
    %v710 = vand.u32 %v58, 4294901760
    %v711 = vsub.f32 %v58, %v710
    %v712 = vand.u32 %v711, 4294901760
    %v713 = vsub.f32 %v711, %v712
    %v714 = vand.u32 %v713, 4294901760
    %715 = vmatpush1.msra.mxu0 %v714
    %716 = vmatprep.subr.mxu0 0.0
    %v717 = vand.u32 %v59, 4294901760
    %v718 = vsub.f32 %v59, %v717
    %v719 = vand.u32 %v718, 4294901760
    %v720 = vsub.f32 %v718, %v719
    %v721 = vand.u32 %v720, 4294901760
    %722 = vmatpush1.msra.mxu0 %v721
    %723 = vmatprep.subr.mxu0 0.0
    %v724 = vand.u32 %v60, 4294901760
    %v725 = vsub.f32 %v60, %v724
    %v726 = vand.u32 %v725, 4294901760
    %v727 = vsub.f32 %v725, %v726
    %v728 = vand.u32 %v727, 4294901760
    %729 = vmatpush1.msra.mxu0 %v728
    %730 = vmatprep.subr.mxu0 0.0
    %v731 = vand.u32 %v61, 4294901760
    %v732 = vsub.f32 %v61, %v731
    %v733 = vand.u32 %v732, 4294901760
    %v734 = vsub.f32 %v732, %v733
    %v735 = vand.u32 %v734, 4294901760
    %736 = vmatpush1.msra.mxu0 %v735
    %737 = vmatprep.subr.mxu0 0.0
    %v738 = vand.u32 %v62, 4294901760
    %v739 = vsub.f32 %v62, %v738
    %v740 = vand.u32 %v739, 4294901760
    %v741 = vsub.f32 %v739, %v740
    %v742 = vand.u32 %v741, 4294901760
    %743 = vmatpush1.msra.mxu0 %v742
    %744 = vmatprep.subr.mxu0 0.0
    %745 = vmatpush1.msra.mxu0 0.0
    %746 = vmatprep.subr.mxu0 0.0
    %747 = vmatpush1.msra.mxu0 0.0
    %748 = vmatprep.subr.mxu0 0.0
    %749 = vmatpush1.msra.mxu0 0.0
    %750 = vmatprep.subr.mxu0 0.0
    %751 = vmatpush1.msra.mxu0 0.0
    %752 = vmatprep.subr.mxu0 0.0
    %753 = vmatpush1.msra.mxu0 0.0
    %754 = vmatprep.subr.mxu0 0.0
    %755 = vmatpush1.msra.mxu0 0.0
    %756 = vmatprep.subr.mxu0 0.0
    %757 = vmatpush1.msra.mxu0 0.0
    %758 = vmatprep.subr.mxu0 0.0
    %759 = vmatpush1.msra.mxu0 0.0
    %760 = vmatprep.subr.mxu0 0.0
    %761 = vmatpush1.msra.mxu0 0.0
    %762 = vmatprep.subr.mxu0 0.0
    %763 = vmatpush1.msra.mxu0 0.0
    %764 = vmatprep.subr.mxu0 0.0
    %765 = vmatpush1.msra.mxu0 0.0
    %766 = vmatprep.subr.mxu0 0.0
    %767 = vmatpush1.msra.mxu0 0.0
    %768 = vmatprep.subr.mxu0 0.0
    %769 = vmatpush1.msra.mxu0 0.0
    %770 = vmatprep.subr.mxu0 0.0
    %771 = vmatpush1.msra.mxu0 0.0
    %772 = vmatprep.subr.mxu0 0.0
    %773 = vmatpush1.msra.mxu0 0.0
    %774 = vmatprep.subr.mxu0 0.0
    %775 = vmatpush1.msra.mxu0 0.0
    %776 = vmatprep.subr.mxu0 0.0
    %777 = vmatpush1.msra.mxu0 0.0
    %778 = vmatprep.subr.mxu0 0.0
    %779 = vmatpush1.msra.mxu0 0.0
    %780 = vmatprep.subr.mxu0 0.0
    %781 = vmatpush1.msra.mxu0 0.0
    %782 = vmatprep.subr.mxu0 0.0
    %783 = vmatpush1.msra.mxu0 0.0
    %784 = vmatprep.subr.mxu0 0.0
    %785 = vmatpush1.msra.mxu0 0.0
    %786 = vmatprep.subr.mxu0 0.0
    %787 = vmatpush1.msra.mxu0 0.0
    %788 = vmatprep.subr.mxu0 0.0
    %789 = vmatpush1.msra.mxu0 0.0
    %790 = vmatprep.subr.mxu0 0.0
    %791 = vmatpush1.msra.mxu0 0.0
    %792 = vmatprep.mubr.f32.mxu0 0.0
    %v793 = vand.u32 %v590, 4294901760
    %794 = vmatmul.mubr.f32.gmra.mrb[0].mxu0 %v793
    %v795 = vpop.f32.mrb[0].mxu0
    %v796 = vadd.f32 %v675, %v795
    %v797 = vpop.f32.mrb[0].mxu0
    %798 = vmatprep.mubr.f32.mxu0 0.0
    %v799 = vand.u32 %v593, 4294901760
    %800 = vmatmul.mubr.f32.gmra.mrb[0].mxu0 %v799
    %v801 = vpop.f32.mrb[0].mxu0
    %v802 = vadd.f32 %v685, %v801
    %v803 = vpop.f32.mrb[0].mxu0
    %804 = vdwg.mxu0
    %805 = vmatprep.subr.mxu0 0.0
    %v806 = vand.u32 %v55, 4294901760
    %v807 = vsub.f32 %v55, %v806
    %808 = vmatpush1.msra.mxu0 %v807
    %809 = vmatprep.subr.mxu0 0.0
    %v810 = vand.u32 %v56, 4294901760
    %v811 = vsub.f32 %v56, %v810
    %812 = vmatpush1.msra.mxu0 %v811
    %813 = vmatprep.subr.mxu0 0.0
    %v814 = vand.u32 %v57, 4294901760
    %v815 = vsub.f32 %v57, %v814
    %816 = vmatpush1.msra.mxu0 %v815
    %817 = vmatprep.subr.mxu0 0.0
    %v818 = vand.u32 %v58, 4294901760
    %v819 = vsub.f32 %v58, %v818
    %820 = vmatpush1.msra.mxu0 %v819
    %821 = vmatprep.subr.mxu0 0.0
    %v822 = vand.u32 %v59, 4294901760
    %v823 = vsub.f32 %v59, %v822
    %824 = vmatpush1.msra.mxu0 %v823
    %825 = vmatprep.subr.mxu0 0.0
    %v826 = vand.u32 %v60, 4294901760
    %v827 = vsub.f32 %v60, %v826
    %828 = vmatpush1.msra.mxu0 %v827
    %829 = vmatprep.subr.mxu0 0.0
    %v830 = vand.u32 %v61, 4294901760
    %v831 = vsub.f32 %v61, %v830
    %832 = vmatpush1.msra.mxu0 %v831
    %833 = vmatprep.subr.mxu0 0.0
    %v834 = vand.u32 %v62, 4294901760
    %v835 = vsub.f32 %v62, %v834
    %836 = vmatpush1.msra.mxu0 %v835
    %837 = vmatprep.subr.mxu0 0.0
    %838 = vmatpush1.msra.mxu0 0.0
    %839 = vmatprep.subr.mxu0 0.0
    %840 = vmatpush1.msra.mxu0 0.0
    %841 = vmatprep.subr.mxu0 0.0
    %842 = vmatpush1.msra.mxu0 0.0
    %843 = vmatprep.subr.mxu0 0.0
    %844 = vmatpush1.msra.mxu0 0.0
    %845 = vmatprep.subr.mxu0 0.0
    %846 = vmatpush1.msra.mxu0 0.0
    %847 = vmatprep.subr.mxu0 0.0
    %848 = vmatpush1.msra.mxu0 0.0
    %849 = vmatprep.subr.mxu0 0.0
    %850 = vmatpush1.msra.mxu0 0.0
    %851 = vmatprep.subr.mxu0 0.0
    %852 = vmatpush1.msra.mxu0 0.0
    %853 = vmatprep.subr.mxu0 0.0
    %854 = vmatpush1.msra.mxu0 0.0
    %855 = vmatprep.subr.mxu0 0.0
    %856 = vmatpush1.msra.mxu0 0.0
    %857 = vmatprep.subr.mxu0 0.0
    %858 = vmatpush1.msra.mxu0 0.0
    %859 = vmatprep.subr.mxu0 0.0
    %860 = vmatpush1.msra.mxu0 0.0
    %861 = vmatprep.subr.mxu0 0.0
    %862 = vmatpush1.msra.mxu0 0.0
    %863 = vmatprep.subr.mxu0 0.0
    %864 = vmatpush1.msra.mxu0 0.0
    %865 = vmatprep.subr.mxu0 0.0
    %866 = vmatpush1.msra.mxu0 0.0
    %867 = vmatprep.subr.mxu0 0.0
    %868 = vmatpush1.msra.mxu0 0.0
    %869 = vmatprep.subr.mxu0 0.0
    %870 = vmatpush1.msra.mxu0 0.0
    %871 = vmatprep.subr.mxu0 0.0
    %872 = vmatpush1.msra.mxu0 0.0
    %873 = vmatprep.subr.mxu0 0.0
    %874 = vmatpush1.msra.mxu0 0.0
    %875 = vmatprep.subr.mxu0 0.0
    %876 = vmatpush1.msra.mxu0 0.0
    %877 = vmatprep.subr.mxu0 0.0
    %878 = vmatpush1.msra.mxu0 0.0
    %879 = vmatprep.subr.mxu0 0.0
    %880 = vmatpush1.msra.mxu0 0.0
    %881 = vmatprep.subr.mxu0 0.0
    %882 = vmatpush1.msra.mxu0 0.0
    %883 = vmatprep.subr.mxu0 0.0
    %884 = vmatpush1.msra.mxu0 0.0
    %885 = vmatprep.mubr.f32.mxu0 0.0
    %v886 = vand.u32 %v590, 4294901760
    %v887 = vsub.f32 %v590, %v886
    %888 = vmatmul.mubr.f32.gmra.mrb[0].mxu0 %v887
    %v889 = vpop.f32.mrb[0].mxu0
    %v890 = vadd.f32 %v796, %v889
    %v891 = vpop.f32.mrb[0].mxu0
    %892 = vmatprep.mubr.f32.mxu0 0.0
    %v893 = vand.u32 %v593, 4294901760
    %v894 = vsub.f32 %v593, %v893
    %895 = vmatmul.mubr.f32.gmra.mrb[0].mxu0 %v894
    %v896 = vpop.f32.mrb[0].mxu0
    %v897 = vadd.f32 %v802, %v896
    %v898 = vpop.f32.mrb[0].mxu0
    %899 = vdwg.mxu0
    %900 = vmatprep.subr.mxu0 0.0
    %v901 = vand.u32 %v55, 4294901760
    %902 = vmatpush1.msra.mxu0 %v901
    %903 = vmatprep.subr.mxu0 0.0
    %v904 = vand.u32 %v56, 4294901760
    %905 = vmatpush1.msra.mxu0 %v904
    %906 = vmatprep.subr.mxu0 0.0
    %v907 = vand.u32 %v57, 4294901760
    %908 = vmatpush1.msra.mxu0 %v907
    %909 = vmatprep.subr.mxu0 0.0
    %v910 = vand.u32 %v58, 4294901760
    %911 = vmatpush1.msra.mxu0 %v910
    %912 = vmatprep.subr.mxu0 0.0
    %v913 = vand.u32 %v59, 4294901760
    %914 = vmatpush1.msra.mxu0 %v913
    %915 = vmatprep.subr.mxu0 0.0
    %v916 = vand.u32 %v60, 4294901760
    %917 = vmatpush1.msra.mxu0 %v916
    %918 = vmatprep.subr.mxu0 0.0
    %v919 = vand.u32 %v61, 4294901760
    %920 = vmatpush1.msra.mxu0 %v919
    %921 = vmatprep.subr.mxu0 0.0
    %v922 = vand.u32 %v62, 4294901760
    %923 = vmatpush1.msra.mxu0 %v922
    %924 = vmatprep.subr.mxu0 0.0
    %925 = vmatpush1.msra.mxu0 0.0
    %926 = vmatprep.subr.mxu0 0.0
    %927 = vmatpush1.msra.mxu0 0.0
    %928 = vmatprep.subr.mxu0 0.0
    %929 = vmatpush1.msra.mxu0 0.0
    %930 = vmatprep.subr.mxu0 0.0
    %931 = vmatpush1.msra.mxu0 0.0
    %932 = vmatprep.subr.mxu0 0.0
    %933 = vmatpush1.msra.mxu0 0.0
    %934 = vmatprep.subr.mxu0 0.0
    %935 = vmatpush1.msra.mxu0 0.0
    %936 = vmatprep.subr.mxu0 0.0
    %937 = vmatpush1.msra.mxu0 0.0
    %938 = vmatprep.subr.mxu0 0.0
    %939 = vmatpush1.msra.mxu0 0.0
    %940 = vmatprep.subr.mxu0 0.0
    %941 = vmatpush1.msra.mxu0 0.0
    %942 = vmatprep.subr.mxu0 0.0
    %943 = vmatpush1.msra.mxu0 0.0
    %944 = vmatprep.subr.mxu0 0.0
    %945 = vmatpush1.msra.mxu0 0.0
    %946 = vmatprep.subr.mxu0 0.0
    %947 = vmatpush1.msra.mxu0 0.0
    %948 = vmatprep.subr.mxu0 0.0
    %949 = vmatpush1.msra.mxu0 0.0
    %950 = vmatprep.subr.mxu0 0.0
    %951 = vmatpush1.msra.mxu0 0.0
    %952 = vmatprep.subr.mxu0 0.0
    %953 = vmatpush1.msra.mxu0 0.0
    %954 = vmatprep.subr.mxu0 0.0
    %955 = vmatpush1.msra.mxu0 0.0
    %956 = vmatprep.subr.mxu0 0.0
    %957 = vmatpush1.msra.mxu0 0.0
    %958 = vmatprep.subr.mxu0 0.0
    %959 = vmatpush1.msra.mxu0 0.0
    %960 = vmatprep.subr.mxu0 0.0
    %961 = vmatpush1.msra.mxu0 0.0
    %962 = vmatprep.subr.mxu0 0.0
    %963 = vmatpush1.msra.mxu0 0.0
    %964 = vmatprep.subr.mxu0 0.0
    %965 = vmatpush1.msra.mxu0 0.0
    %966 = vmatprep.subr.mxu0 0.0
    %967 = vmatpush1.msra.mxu0 0.0
    %968 = vmatprep.subr.mxu0 0.0
    %969 = vmatpush1.msra.mxu0 0.0
    %970 = vmatprep.subr.mxu0 0.0
    %971 = vmatpush1.msra.mxu0 0.0
    %972 = vmatprep.mubr.f32.mxu0 0.0
    %v973 = vand.u32 %v590, 4294901760
    %v974 = vsub.f32 %v590, %v973
    %v975 = vand.u32 %v974, 4294901760
    %976 = vmatmul.mubr.f32.gmra.mrb[0].mxu0 %v975
    %v977 = vpop.f32.mrb[0].mxu0
    %v978 = vadd.f32 %v890, %v977
    %v979 = vpop.f32.mrb[0].mxu0
    %980 = vmatprep.mubr.f32.mxu0 0.0
    %v981 = vand.u32 %v593, 4294901760
    %v982 = vsub.f32 %v593, %v981
    %v983 = vand.u32 %v982, 4294901760
    %984 = vmatmul.mubr.f32.gmra.mrb[0].mxu0 %v983
    %v985 = vpop.f32.mrb[0].mxu0
    %v986 = vadd.f32 %v897, %v985
    %v987 = vpop.f32.mrb[0].mxu0
    %988 = vdwg.mxu0
    %989 = vmatprep.subr.mxu0 0.0
    %v990 = vand.u32 %v55, 4294901760
    %v991 = vsub.f32 %v55, %v990
    %v992 = vand.u32 %v991, 4294901760
    %993 = vmatpush1.msra.mxu0 %v992
    %994 = vmatprep.subr.mxu0 0.0
    %v995 = vand.u32 %v56, 4294901760
    %v996 = vsub.f32 %v56, %v995
    %v997 = vand.u32 %v996, 4294901760
    %998 = vmatpush1.msra.mxu0 %v997
    %999 = vmatprep.subr.mxu0 0.0
    %v1000 = vand.u32 %v57, 4294901760
    %v1001 = vsub.f32 %v57, %v1000
    %v1002 = vand.u32 %v1001, 4294901760
    %1003 = vmatpush1.msra.mxu0 %v1002
    %1004 = vmatprep.subr.mxu0 0.0
    %v1005 = vand.u32 %v58, 4294901760
    %v1006 = vsub.f32 %v58, %v1005
    %v1007 = vand.u32 %v1006, 4294901760
    %1008 = vmatpush1.msra.mxu0 %v1007
    %1009 = vmatprep.subr.mxu0 0.0
    %v1010 = vand.u32 %v59, 4294901760
    %v1011 = vsub.f32 %v59, %v1010
    %v1012 = vand.u32 %v1011, 4294901760
    %1013 = vmatpush1.msra.mxu0 %v1012
    %1014 = vmatprep.subr.mxu0 0.0
    %v1015 = vand.u32 %v60, 4294901760
    %v1016 = vsub.f32 %v60, %v1015
    %v1017 = vand.u32 %v1016, 4294901760
    %1018 = vmatpush1.msra.mxu0 %v1017
    %1019 = vmatprep.subr.mxu0 0.0
    %v1020 = vand.u32 %v61, 4294901760
    %v1021 = vsub.f32 %v61, %v1020
    %v1022 = vand.u32 %v1021, 4294901760
    %1023 = vmatpush1.msra.mxu0 %v1022
    %1024 = vmatprep.subr.mxu0 0.0
    %v1025 = vand.u32 %v62, 4294901760
    %v1026 = vsub.f32 %v62, %v1025
    %v1027 = vand.u32 %v1026, 4294901760
    %1028 = vmatpush1.msra.mxu0 %v1027
    %1029 = vmatprep.subr.mxu0 0.0
    %1030 = vmatpush1.msra.mxu0 0.0
    %1031 = vmatprep.subr.mxu0 0.0
    %1032 = vmatpush1.msra.mxu0 0.0
    %1033 = vmatprep.subr.mxu0 0.0
    %1034 = vmatpush1.msra.mxu0 0.0
    %1035 = vmatprep.subr.mxu0 0.0
    %1036 = vmatpush1.msra.mxu0 0.0
    %1037 = vmatprep.subr.mxu0 0.0
    %1038 = vmatpush1.msra.mxu0 0.0
    %1039 = vmatprep.subr.mxu0 0.0
    %1040 = vmatpush1.msra.mxu0 0.0
    %1041 = vmatprep.subr.mxu0 0.0
    %1042 = vmatpush1.msra.mxu0 0.0
    %1043 = vmatprep.subr.mxu0 0.0
    %1044 = vmatpush1.msra.mxu0 0.0
    %1045 = vmatprep.subr.mxu0 0.0
    %1046 = vmatpush1.msra.mxu0 0.0
    %1047 = vmatprep.subr.mxu0 0.0
    %1048 = vmatpush1.msra.mxu0 0.0
    %1049 = vmatprep.subr.mxu0 0.0
    %1050 = vmatpush1.msra.mxu0 0.0
    %1051 = vmatprep.subr.mxu0 0.0
    %1052 = vmatpush1.msra.mxu0 0.0
    %1053 = vmatprep.subr.mxu0 0.0
    %1054 = vmatpush1.msra.mxu0 0.0
    %1055 = vmatprep.subr.mxu0 0.0
    %1056 = vmatpush1.msra.mxu0 0.0
    %1057 = vmatprep.subr.mxu0 0.0
    %1058 = vmatpush1.msra.mxu0 0.0
    %1059 = vmatprep.subr.mxu0 0.0
    %1060 = vmatpush1.msra.mxu0 0.0
    %1061 = vmatprep.subr.mxu0 0.0
    %1062 = vmatpush1.msra.mxu0 0.0
    %1063 = vmatprep.subr.mxu0 0.0
    %1064 = vmatpush1.msra.mxu0 0.0
    %1065 = vmatprep.subr.mxu0 0.0
    %1066 = vmatpush1.msra.mxu0 0.0
    %1067 = vmatprep.subr.mxu0 0.0
    %1068 = vmatpush1.msra.mxu0 0.0
    %1069 = vmatprep.subr.mxu0 0.0
    %1070 = vmatpush1.msra.mxu0 0.0
    %1071 = vmatprep.subr.mxu0 0.0
    %1072 = vmatpush1.msra.mxu0 0.0
    %1073 = vmatprep.subr.mxu0 0.0
    %1074 = vmatpush1.msra.mxu0 0.0
    %1075 = vmatprep.subr.mxu0 0.0
    %1076 = vmatpush1.msra.mxu0 0.0
    %1077 = vmatprep.mubr.f32.mxu0 0.0
    %v1078 = vand.u32 %v590, 4294901760
    %1079 = vmatmul.mubr.f32.gmra.mrb[0].mxu0 %v1078
    %v1080 = vpop.f32.mrb[0].mxu0
    %v1081 = vadd.f32 %v978, %v1080
    %v1082 = vpop.f32.mrb[0].mxu0
    %1083 = vmatprep.mubr.f32.mxu0 0.0
    %v1084 = vand.u32 %v593, 4294901760
    %1085 = vmatmul.mubr.f32.gmra.mrb[0].mxu0 %v1084
    %v1086 = vpop.f32.mrb[0].mxu0
    %v1087 = vadd.f32 %v986, %v1086
    %v1088 = vpop.f32.mrb[0].mxu0
    %1089 = vdwg.mxu0
    %1090 = vmatprep.subr.mxu0 0.0
    %v1091 = vand.u32 %v55, 4294901760
    %1092 = vmatpush1.msra.mxu0 %v1091
    %1093 = vmatprep.subr.mxu0 0.0
    %v1094 = vand.u32 %v56, 4294901760
    %1095 = vmatpush1.msra.mxu0 %v1094
    %1096 = vmatprep.subr.mxu0 0.0
    %v1097 = vand.u32 %v57, 4294901760
    %1098 = vmatpush1.msra.mxu0 %v1097
    %1099 = vmatprep.subr.mxu0 0.0
    %v1100 = vand.u32 %v58, 4294901760
    %1101 = vmatpush1.msra.mxu0 %v1100
    %1102 = vmatprep.subr.mxu0 0.0
    %v1103 = vand.u32 %v59, 4294901760
    %1104 = vmatpush1.msra.mxu0 %v1103
    %1105 = vmatprep.subr.mxu0 0.0
    %v1106 = vand.u32 %v60, 4294901760
    %1107 = vmatpush1.msra.mxu0 %v1106
    %1108 = vmatprep.subr.mxu0 0.0
    %v1109 = vand.u32 %v61, 4294901760
    %1110 = vmatpush1.msra.mxu0 %v1109
    %1111 = vmatprep.subr.mxu0 0.0
    %v1112 = vand.u32 %v62, 4294901760
    %1113 = vmatpush1.msra.mxu0 %v1112
    %1114 = vmatprep.subr.mxu0 0.0
    %1115 = vmatpush1.msra.mxu0 0.0
    %1116 = vmatprep.subr.mxu0 0.0
    %1117 = vmatpush1.msra.mxu0 0.0
    %1118 = vmatprep.subr.mxu0 0.0
    %1119 = vmatpush1.msra.mxu0 0.0
    %1120 = vmatprep.subr.mxu0 0.0
    %1121 = vmatpush1.msra.mxu0 0.0
    %1122 = vmatprep.subr.mxu0 0.0
    %1123 = vmatpush1.msra.mxu0 0.0
    %1124 = vmatprep.subr.mxu0 0.0
    %1125 = vmatpush1.msra.mxu0 0.0
    %1126 = vmatprep.subr.mxu0 0.0
    %1127 = vmatpush1.msra.mxu0 0.0
    %1128 = vmatprep.subr.mxu0 0.0
    %1129 = vmatpush1.msra.mxu0 0.0
    %1130 = vmatprep.subr.mxu0 0.0
    %1131 = vmatpush1.msra.mxu0 0.0
    %1132 = vmatprep.subr.mxu0 0.0
    %1133 = vmatpush1.msra.mxu0 0.0
    %1134 = vmatprep.subr.mxu0 0.0
    %1135 = vmatpush1.msra.mxu0 0.0
    %1136 = vmatprep.subr.mxu0 0.0
    %1137 = vmatpush1.msra.mxu0 0.0
    %1138 = vmatprep.subr.mxu0 0.0
    %1139 = vmatpush1.msra.mxu0 0.0
    %1140 = vmatprep.subr.mxu0 0.0
    %1141 = vmatpush1.msra.mxu0 0.0
    %1142 = vmatprep.subr.mxu0 0.0
    %1143 = vmatpush1.msra.mxu0 0.0
    %1144 = vmatprep.subr.mxu0 0.0
    %1145 = vmatpush1.msra.mxu0 0.0
    %1146 = vmatprep.subr.mxu0 0.0
    %1147 = vmatpush1.msra.mxu0 0.0
    %1148 = vmatprep.subr.mxu0 0.0
    %1149 = vmatpush1.msra.mxu0 0.0
    %1150 = vmatprep.subr.mxu0 0.0
    %1151 = vmatpush1.msra.mxu0 0.0
    %1152 = vmatprep.subr.mxu0 0.0
    %1153 = vmatpush1.msra.mxu0 0.0
    %1154 = vmatprep.subr.mxu0 0.0
    %1155 = vmatpush1.msra.mxu0 0.0
    %1156 = vmatprep.subr.mxu0 0.0
    %1157 = vmatpush1.msra.mxu0 0.0
    %1158 = vmatprep.subr.mxu0 0.0
    %1159 = vmatpush1.msra.mxu0 0.0
    %1160 = vmatprep.subr.mxu0 0.0
    %1161 = vmatpush1.msra.mxu0 0.0
    %1162 = vmatprep.mubr.f32.mxu0 0.0
    %v1163 = vand.u32 %v590, 4294901760
    %1164 = vmatmul.mubr.f32.gmra.mrb[0].mxu0 %v1163
    %v1165 = vpop.f32.mrb[0].mxu0
    %v1166 = vadd.f32 %v1081, %v1165
    %v1167 = vpop.f32.mrb[0].mxu0
    %1168 = vmatprep.mubr.f32.mxu0 0.0
    %v1169 = vand.u32 %v593, 4294901760
    %1170 = vmatmul.mubr.f32.gmra.mrb[0].mxu0 %v1169
    %v1171 = vpop.f32.mrb[0].mxu0
    %v1172 = vadd.f32 %v1087, %v1171
    %v1173 = vpop.f32.mrb[0].mxu0
    %1174 = vdwg.mxu0
    %v1175 = vld [vmem:[%s2] sm:$0xff]
    %v1176 = vld [vmem:[%s2 + $0x8] sm:$0xff]
    %v1177 = vld [vmem:[#allocation5] sm:$0xff]
    %v1178 = vld [vmem:[#allocation5 + $0x8] sm:$0xff]
    %v1179 = vld [vmem:[#allocation5 + $0x10] sm:$0xff]
    %v1180 = vld [vmem:[#allocation5 + $0x18] sm:$0xff]
    %v1181 = vld [vmem:[#allocation5 + $0x20] sm:$0xff]
    %v1182 = vld [vmem:[#allocation5 + $0x28] sm:$0xff]
    %v1183 = vld [vmem:[#allocation5 + $0x30] sm:$0xff]
    %v1184 = vld [vmem:[#allocation5 + $0x38] sm:$0xff]
    %v1185 = vld [vmem:[#allocation5 + $0x40] sm:$0xff]
    %v1186 = vld [vmem:[#allocation5 + $0x48] sm:$0xff]
    %v1187 = vld [vmem:[#allocation5 + $0x50] sm:$0xff]
    %v1188 = vld [vmem:[#allocation5 + $0x58] sm:$0xff]
    %v1189 = vld [vmem:[#allocation5 + $0x60] sm:$0xff]
    %v1190 = vld [vmem:[#allocation5 + $0x68] sm:$0xff]
    %v1191 = vld [vmem:[#allocation5 + $0x70] sm:$0xff]
    %v1192 = vld [vmem:[#allocation5 + $0x78] sm:$0xff]
    %1193 = vset.pattern.permute.xlu0 0
    %1194 = vperm.xlu0 %1193, %v1175
    %v1195 = vpop.permute.xlu0 %1194
    %1196 = vset.pattern.permute.xlu0 0
    %1197 = vperm.xlu0 %1196, %v1176
    %v1198 = vpop.permute.xlu0 %1197
    %vm1199 = vcmp.eq.s32.totalorder %v64, %v1195
    %vm1200 = vcmp.eq.s32.totalorder %v64, %v1198
    %v1201 = vsel %vm1199, 1, 0
    %v1202 = vsel %vm1200, 1, 0
    %v1203 = vcvt.s32.f32 %v1201
    %v1204 = vcvt.s32.f32 %v1202
    %1205 = vmatprep.subr.mxu0 0.0
    %v1206 = vand.u32 %v1177, 4294901760
    %1207 = vmatpush1.msra.mxu0 %v1206
    %1208 = vmatprep.subr.mxu0 0.0
    %v1209 = vand.u32 %v1178, 4294901760
    %1210 = vmatpush1.msra.mxu0 %v1209
    %1211 = vmatprep.subr.mxu0 0.0
    %v1212 = vand.u32 %v1179, 4294901760
    %1213 = vmatpush1.msra.mxu0 %v1212
    %1214 = vmatprep.subr.mxu0 0.0
    %v1215 = vand.u32 %v1180, 4294901760
    %1216 = vmatpush1.msra.mxu0 %v1215
    %1217 = vmatprep.subr.mxu0 0.0
    %v1218 = vand.u32 %v1181, 4294901760
    %1219 = vmatpush1.msra.mxu0 %v1218
    %1220 = vmatprep.subr.mxu0 0.0
    %v1221 = vand.u32 %v1182, 4294901760
    %1222 = vmatpush1.msra.mxu0 %v1221
    %1223 = vmatprep.subr.mxu0 0.0
    %v1224 = vand.u32 %v1183, 4294901760
    %1225 = vmatpush1.msra.mxu0 %v1224
    %1226 = vmatprep.subr.mxu0 0.0
    %v1227 = vand.u32 %v1184, 4294901760
    %1228 = vmatpush1.msra.mxu0 %v1227
    %1229 = vmatprep.subr.mxu0 0.0
    %v1230 = vand.u32 %v1185, 4294901760
    %1231 = vmatpush1.msra.mxu0 %v1230
    %1232 = vmatprep.subr.mxu0 0.0
    %v1233 = vand.u32 %v1186, 4294901760
    %1234 = vmatpush1.msra.mxu0 %v1233
    %1235 = vmatprep.subr.mxu0 0.0
    %v1236 = vand.u32 %v1187, 4294901760
    %1237 = vmatpush1.msra.mxu0 %v1236
    %1238 = vmatprep.subr.mxu0 0.0
    %v1239 = vand.u32 %v1188, 4294901760
    %1240 = vmatpush1.msra.mxu0 %v1239
    %1241 = vmatprep.subr.mxu0 0.0
    %v1242 = vand.u32 %v1189, 4294901760
    %1243 = vmatpush1.msra.mxu0 %v1242
    %1244 = vmatprep.subr.mxu0 0.0
    %v1245 = vand.u32 %v1190, 4294901760
    %1246 = vmatpush1.msra.mxu0 %v1245
    %1247 = vmatprep.subr.mxu0 0.0
    %v1248 = vand.u32 %v1191, 4294901760
    %1249 = vmatpush1.msra.mxu0 %v1248
    %1250 = vmatprep.subr.mxu0 0.0
    %v1251 = vand.u32 %v1192, 4294901760
    %1252 = vmatpush1.msra.mxu0 %v1251
    %1253 = vmatprep.subr.mxu0 0.0
    %1254 = vmatpush1.msra.mxu0 0.0
    %1255 = vmatprep.subr.mxu0 0.0
    %1256 = vmatpush1.msra.mxu0 0.0
    %1257 = vmatprep.subr.mxu0 0.0
    %1258 = vmatpush1.msra.mxu0 0.0
    %1259 = vmatprep.subr.mxu0 0.0
    %1260 = vmatpush1.msra.mxu0 0.0
    %1261 = vmatprep.subr.mxu0 0.0
    %1262 = vmatpush1.msra.mxu0 0.0
    %1263 = vmatprep.subr.mxu0 0.0
    %1264 = vmatpush1.msra.mxu0 0.0
    %1265 = vmatprep.subr.mxu0 0.0
    %1266 = vmatpush1.msra.mxu0 0.0
    %1267 = vmatprep.subr.mxu0 0.0
    %1268 = vmatpush1.msra.mxu0 0.0
    %1269 = vmatprep.subr.mxu0 0.0
    %1270 = vmatpush1.msra.mxu0 0.0
    %1271 = vmatprep.subr.mxu0 0.0
    %1272 = vmatpush1.msra.mxu0 0.0
    %1273 = vmatprep.subr.mxu0 0.0
    %1274 = vmatpush1.msra.mxu0 0.0
    %1275 = vmatprep.subr.mxu0 0.0
    %1276 = vmatpush1.msra.mxu0 0.0
    %1277 = vmatprep.subr.mxu0 0.0
    %1278 = vmatpush1.msra.mxu0 0.0
    %1279 = vmatprep.subr.mxu0 0.0
    %1280 = vmatpush1.msra.mxu0 0.0
    %1281 = vmatprep.subr.mxu0 0.0
    %1282 = vmatpush1.msra.mxu0 0.0
    %1283 = vmatprep.subr.mxu0 0.0
    %1284 = vmatpush1.msra.mxu0 0.0
    %1285 = vmatprep.mubr.f32.mxu0 0.0
    %v1286 = vand.u32 %v1203, 4294901760
    %v1287 = vsub.f32 %v1203, %v1286
    %v1288 = vand.u32 %v1287, 4294901760
    %v1289 = vsub.f32 %v1287, %v1288
    %v1290 = vand.u32 %v1289, 4294901760
    %1291 = vmatmul.mubr.f32.gmra.mrb[0].mxu0 %v1290
    %v1292 = vpop.f32.mrb[0].mxu0
    %v1293 = vadd.f32 0.0, %v1292
    %v1294 = vpop.f32.mrb[0].mxu0
    %1295 = vmatprep.mubr.f32.mxu0 0.0
    %v1296 = vand.u32 %v1204, 4294901760
    %v1297 = vsub.f32 %v1204, %v1296
    %v1298 = vand.u32 %v1297, 4294901760
    %v1299 = vsub.f32 %v1297, %v1298
    %v1300 = vand.u32 %v1299, 4294901760
    %1301 = vmatmul.mubr.f32.gmra.mrb[0].mxu0 %v1300
    %v1302 = vpop.f32.mrb[0].mxu0
    %v1303 = vadd.f32 0.0, %v1302
    %v1304 = vpop.f32.mrb[0].mxu0
    %1305 = vdwg.mxu0
    %1306 = vmatprep.subr.mxu0 0.0
    %v1307 = vand.u32 %v1177, 4294901760
    %v1308 = vsub.f32 %v1177, %v1307
    %v1309 = vand.u32 %v1308, 4294901760
    %v1310 = vsub.f32 %v1308, %v1309
    %v1311 = vand.u32 %v1310, 4294901760
    %1312 = vmatpush1.msra.mxu0 %v1311
    %1313 = vmatprep.subr.mxu0 0.0
    %v1314 = vand.u32 %v1178, 4294901760
    %v1315 = vsub.f32 %v1178, %v1314
    %v1316 = vand.u32 %v1315, 4294901760
    %v1317 = vsub.f32 %v1315, %v1316
    %v1318 = vand.u32 %v1317, 4294901760
    %1319 = vmatpush1.msra.mxu0 %v1318
    %1320 = vmatprep.subr.mxu0 0.0
    %v1321 = vand.u32 %v1179, 4294901760
    %v1322 = vsub.f32 %v1179, %v1321
    %v1323 = vand.u32 %v1322, 4294901760
    %v1324 = vsub.f32 %v1322, %v1323
    %v1325 = vand.u32 %v1324, 4294901760
    %1326 = vmatpush1.msra.mxu0 %v1325
    %1327 = vmatprep.subr.mxu0 0.0
    %v1328 = vand.u32 %v1180, 4294901760
    %v1329 = vsub.f32 %v1180, %v1328
    %v1330 = vand.u32 %v1329, 4294901760
    %v1331 = vsub.f32 %v1329, %v1330
    %v1332 = vand.u32 %v1331, 4294901760
    %1333 = vmatpush1.msra.mxu0 %v1332
    %1334 = vmatprep.subr.mxu0 0.0
    %v1335 = vand.u32 %v1181, 4294901760
    %v1336 = vsub.f32 %v1181, %v1335
    %v1337 = vand.u32 %v1336, 4294901760
    %v1338 = vsub.f32 %v1336, %v1337
    %v1339 = vand.u32 %v1338, 4294901760
    %1340 = vmatpush1.msra.mxu0 %v1339
    %1341 = vmatprep.subr.mxu0 0.0
    %v1342 = vand.u32 %v1182, 4294901760
    %v1343 = vsub.f32 %v1182, %v1342
    %v1344 = vand.u32 %v1343, 4294901760
    %v1345 = vsub.f32 %v1343, %v1344
    %v1346 = vand.u32 %v1345, 4294901760
    %1347 = vmatpush1.msra.mxu0 %v1346
    %1348 = vmatprep.subr.mxu0 0.0
    %v1349 = vand.u32 %v1183, 4294901760
    %v1350 = vsub.f32 %v1183, %v1349
    %v1351 = vand.u32 %v1350, 4294901760
    %v1352 = vsub.f32 %v1350, %v1351
    %v1353 = vand.u32 %v1352, 4294901760
    %1354 = vmatpush1.msra.mxu0 %v1353
    %1355 = vmatprep.subr.mxu0 0.0
    %v1356 = vand.u32 %v1184, 4294901760
    %v1357 = vsub.f32 %v1184, %v1356
    %v1358 = vand.u32 %v1357, 4294901760
    %v1359 = vsub.f32 %v1357, %v1358
    %v1360 = vand.u32 %v1359, 4294901760
    %1361 = vmatpush1.msra.mxu0 %v1360
    %1362 = vmatprep.subr.mxu0 0.0
    %v1363 = vand.u32 %v1185, 4294901760
    %v1364 = vsub.f32 %v1185, %v1363
    %v1365 = vand.u32 %v1364, 4294901760
    %v1366 = vsub.f32 %v1364, %v1365
    %v1367 = vand.u32 %v1366, 4294901760
    %1368 = vmatpush1.msra.mxu0 %v1367
    %1369 = vmatprep.subr.mxu0 0.0
    %v1370 = vand.u32 %v1186, 4294901760
    %v1371 = vsub.f32 %v1186, %v1370
    %v1372 = vand.u32 %v1371, 4294901760
    %v1373 = vsub.f32 %v1371, %v1372
    %v1374 = vand.u32 %v1373, 4294901760
    %1375 = vmatpush1.msra.mxu0 %v1374
    %1376 = vmatprep.subr.mxu0 0.0
    %v1377 = vand.u32 %v1187, 4294901760
    %v1378 = vsub.f32 %v1187, %v1377
    %v1379 = vand.u32 %v1378, 4294901760
    %v1380 = vsub.f32 %v1378, %v1379
    %v1381 = vand.u32 %v1380, 4294901760
    %1382 = vmatpush1.msra.mxu0 %v1381
    %1383 = vmatprep.subr.mxu0 0.0
    %v1384 = vand.u32 %v1188, 4294901760
    %v1385 = vsub.f32 %v1188, %v1384
    %v1386 = vand.u32 %v1385, 4294901760
    %v1387 = vsub.f32 %v1385, %v1386
    %v1388 = vand.u32 %v1387, 4294901760
    %1389 = vmatpush1.msra.mxu0 %v1388
    %1390 = vmatprep.subr.mxu0 0.0
    %v1391 = vand.u32 %v1189, 4294901760
    %v1392 = vsub.f32 %v1189, %v1391
    %v1393 = vand.u32 %v1392, 4294901760
    %v1394 = vsub.f32 %v1392, %v1393
    %v1395 = vand.u32 %v1394, 4294901760
    %1396 = vmatpush1.msra.mxu0 %v1395
    %1397 = vmatprep.subr.mxu0 0.0
    %v1398 = vand.u32 %v1190, 4294901760
    %v1399 = vsub.f32 %v1190, %v1398
    %v1400 = vand.u32 %v1399, 4294901760
    %v1401 = vsub.f32 %v1399, %v1400
    %v1402 = vand.u32 %v1401, 4294901760
    %1403 = vmatpush1.msra.mxu0 %v1402
    %1404 = vmatprep.subr.mxu0 0.0
    %v1405 = vand.u32 %v1191, 4294901760
    %v1406 = vsub.f32 %v1191, %v1405
    %v1407 = vand.u32 %v1406, 4294901760
    %v1408 = vsub.f32 %v1406, %v1407
    %v1409 = vand.u32 %v1408, 4294901760
    %1410 = vmatpush1.msra.mxu0 %v1409
    %1411 = vmatprep.subr.mxu0 0.0
    %v1412 = vand.u32 %v1192, 4294901760
    %v1413 = vsub.f32 %v1192, %v1412
    %v1414 = vand.u32 %v1413, 4294901760
    %v1415 = vsub.f32 %v1413, %v1414
    %v1416 = vand.u32 %v1415, 4294901760
    %1417 = vmatpush1.msra.mxu0 %v1416
    %1418 = vmatprep.subr.mxu0 0.0
    %1419 = vmatpush1.msra.mxu0 0.0
    %1420 = vmatprep.subr.mxu0 0.0
    %1421 = vmatpush1.msra.mxu0 0.0
    %1422 = vmatprep.subr.mxu0 0.0
    %1423 = vmatpush1.msra.mxu0 0.0
    %1424 = vmatprep.subr.mxu0 0.0
    %1425 = vmatpush1.msra.mxu0 0.0
    %1426 = vmatprep.subr.mxu0 0.0
    %1427 = vmatpush1.msra.mxu0 0.0
    %1428 = vmatprep.subr.mxu0 0.0
    %1429 = vmatpush1.msra.mxu0 0.0
    %1430 = vmatprep.subr.mxu0 0.0
    %1431 = vmatpush1.msra.mxu0 0.0
    %1432 = vmatprep.subr.mxu0 0.0
    %1433 = vmatpush1.msra.mxu0 0.0
    %1434 = vmatprep.subr.mxu0 0.0
    %1435 = vmatpush1.msra.mxu0 0.0
    %1436 = vmatprep.subr.mxu0 0.0
    %1437 = vmatpush1.msra.mxu0 0.0
    %1438 = vmatprep.subr.mxu0 0.0
    %1439 = vmatpush1.msra.mxu0 0.0
    %1440 = vmatprep.subr.mxu0 0.0
    %1441 = vmatpush1.msra.mxu0 0.0
    %1442 = vmatprep.subr.mxu0 0.0
    %1443 = vmatpush1.msra.mxu0 0.0
    %1444 = vmatprep.subr.mxu0 0.0
    %1445 = vmatpush1.msra.mxu0 0.0
    %1446 = vmatprep.subr.mxu0 0.0
    %1447 = vmatpush1.msra.mxu0 0.0
    %1448 = vmatprep.subr.mxu0 0.0
    %1449 = vmatpush1.msra.mxu0 0.0
    %1450 = vmatprep.mubr.f32.mxu0 0.0
    %v1451 = vand.u32 %v1203, 4294901760
    %1452 = vmatmul.mubr.f32.gmra.mrb[0].mxu0 %v1451
    %v1453 = vpop.f32.mrb[0].mxu0
    %v1454 = vadd.f32 %v1293, %v1453
    %v1455 = vpop.f32.mrb[0].mxu0
    %1456 = vmatprep.mubr.f32.mxu0 0.0
    %v1457 = vand.u32 %v1204, 4294901760
    %1458 = vmatmul.mubr.f32.gmra.mrb[0].mxu0 %v1457
    %v1459 = vpop.f32.mrb[0].mxu0
    %v1460 = vadd.f32 %v1303, %v1459
    %v1461 = vpop.f32.mrb[0].mxu0
    %1462 = vdwg.mxu0
    %1463 = vmatprep.subr.mxu0 0.0
    %v1464 = vand.u32 %v1177, 4294901760
    %v1465 = vsub.f32 %v1177, %v1464
    %1466 = vmatpush1.msra.mxu0 %v1465
    %1467 = vmatprep.subr.mxu0 0.0
    %v1468 = vand.u32 %v1178, 4294901760
    %v1469 = vsub.f32 %v1178, %v1468
    %1470 = vmatpush1.msra.mxu0 %v1469
    %1471 = vmatprep.subr.mxu0 0.0
    %v1472 = vand.u32 %v1179, 4294901760
    %v1473 = vsub.f32 %v1179, %v1472
    %1474 = vmatpush1.msra.mxu0 %v1473
    %1475 = vmatprep.subr.mxu0 0.0
    %v1476 = vand.u32 %v1180, 4294901760
    %v1477 = vsub.f32 %v1180, %v1476
    %1478 = vmatpush1.msra.mxu0 %v1477
    %1479 = vmatprep.subr.mxu0 0.0
    %v1480 = vand.u32 %v1181, 4294901760
    %v1481 = vsub.f32 %v1181, %v1480
    %1482 = vmatpush1.msra.mxu0 %v1481
    %1483 = vmatprep.subr.mxu0 0.0
    %v1484 = vand.u32 %v1182, 4294901760
    %v1485 = vsub.f32 %v1182, %v1484
    %1486 = vmatpush1.msra.mxu0 %v1485
    %1487 = vmatprep.subr.mxu0 0.0
    %v1488 = vand.u32 %v1183, 4294901760
    %v1489 = vsub.f32 %v1183, %v1488
    %1490 = vmatpush1.msra.mxu0 %v1489
    %1491 = vmatprep.subr.mxu0 0.0
    %v1492 = vand.u32 %v1184, 4294901760
    %v1493 = vsub.f32 %v1184, %v1492
    %1494 = vmatpush1.msra.mxu0 %v1493
    %1495 = vmatprep.subr.mxu0 0.0
    %v1496 = vand.u32 %v1185, 4294901760
    %v1497 = vsub.f32 %v1185, %v1496
    %1498 = vmatpush1.msra.mxu0 %v1497
    %1499 = vmatprep.subr.mxu0 0.0
    %v1500 = vand.u32 %v1186, 4294901760
    %v1501 = vsub.f32 %v1186, %v1500
    %1502 = vmatpush1.msra.mxu0 %v1501
    %1503 = vmatprep.subr.mxu0 0.0
    %v1504 = vand.u32 %v1187, 4294901760
    %v1505 = vsub.f32 %v1187, %v1504
    %1506 = vmatpush1.msra.mxu0 %v1505
    %1507 = vmatprep.subr.mxu0 0.0
    %v1508 = vand.u32 %v1188, 4294901760
    %v1509 = vsub.f32 %v1188, %v1508
    %1510 = vmatpush1.msra.mxu0 %v1509
    %1511 = vmatprep.subr.mxu0 0.0
    %v1512 = vand.u32 %v1189, 4294901760
    %v1513 = vsub.f32 %v1189, %v1512
    %1514 = vmatpush1.msra.mxu0 %v1513
    %1515 = vmatprep.subr.mxu0 0.0
    %v1516 = vand.u32 %v1190, 4294901760
    %v1517 = vsub.f32 %v1190, %v1516
    %1518 = vmatpush1.msra.mxu0 %v1517
    %1519 = vmatprep.subr.mxu0 0.0
    %v1520 = vand.u32 %v1191, 4294901760
    %v1521 = vsub.f32 %v1191, %v1520
    %1522 = vmatpush1.msra.mxu0 %v1521
    %1523 = vmatprep.subr.mxu0 0.0
    %v1524 = vand.u32 %v1192, 4294901760
    %v1525 = vsub.f32 %v1192, %v1524
    %1526 = vmatpush1.msra.mxu0 %v1525
    %1527 = vmatprep.subr.mxu0 0.0
    %1528 = vmatpush1.msra.mxu0 0.0
    %1529 = vmatprep.subr.mxu0 0.0
    %1530 = vmatpush1.msra.mxu0 0.0
    %1531 = vmatprep.subr.mxu0 0.0
    %1532 = vmatpush1.msra.mxu0 0.0
    %1533 = vmatprep.subr.mxu0 0.0
    %1534 = vmatpush1.msra.mxu0 0.0
    %1535 = vmatprep.subr.mxu0 0.0
    %1536 = vmatpush1.msra.mxu0 0.0
    %1537 = vmatprep.subr.mxu0 0.0
    %1538 = vmatpush1.msra.mxu0 0.0
    %1539 = vmatprep.subr.mxu0 0.0
    %1540 = vmatpush1.msra.mxu0 0.0
    %1541 = vmatprep.subr.mxu0 0.0
    %1542 = vmatpush1.msra.mxu0 0.0
    %1543 = vmatprep.subr.mxu0 0.0
    %1544 = vmatpush1.msra.mxu0 0.0
    %1545 = vmatprep.subr.mxu0 0.0
    %1546 = vmatpush1.msra.mxu0 0.0
    %1547 = vmatprep.subr.mxu0 0.0
    %1548 = vmatpush1.msra.mxu0 0.0
    %1549 = vmatprep.subr.mxu0 0.0
    %1550 = vmatpush1.msra.mxu0 0.0
    %1551 = vmatprep.subr.mxu0 0.0
    %1552 = vmatpush1.msra.mxu0 0.0
    %1553 = vmatprep.subr.mxu0 0.0
    %1554 = vmatpush1.msra.mxu0 0.0
    %1555 = vmatprep.subr.mxu0 0.0
    %1556 = vmatpush1.msra.mxu0 0.0
    %1557 = vmatprep.subr.mxu0 0.0
    %1558 = vmatpush1.msra.mxu0 0.0
    %1559 = vmatprep.mubr.f32.mxu0 0.0
    %v1560 = vand.u32 %v1203, 4294901760
    %v1561 = vsub.f32 %v1203, %v1560
    %1562 = vmatmul.mubr.f32.gmra.mrb[0].mxu0 %v1561
    %v1563 = vpop.f32.mrb[0].mxu0
    %v1564 = vadd.f32 %v1454, %v1563
    %v1565 = vpop.f32.mrb[0].mxu0
    %1566 = vmatprep.mubr.f32.mxu0 0.0
    %v1567 = vand.u32 %v1204, 4294901760
    %v1568 = vsub.f32 %v1204, %v1567
    %1569 = vmatmul.mubr.f32.gmra.mrb[0].mxu0 %v1568
    %v1570 = vpop.f32.mrb[0].mxu0
    %v1571 = vadd.f32 %v1460, %v1570
    %v1572 = vpop.f32.mrb[0].mxu0
    %1573 = vdwg.mxu0
    %1574 = vmatprep.subr.mxu0 0.0
    %v1575 = vand.u32 %v1177, 4294901760
    %1576 = vmatpush1.msra.mxu0 %v1575
    %1577 = vmatprep.subr.mxu0 0.0
    %v1578 = vand.u32 %v1178, 4294901760
    %1579 = vmatpush1.msra.mxu0 %v1578
    %1580 = vmatprep.subr.mxu0 0.0
    %v1581 = vand.u32 %v1179, 4294901760
    %1582 = vmatpush1.msra.mxu0 %v1581
    %1583 = vmatprep.subr.mxu0 0.0
    %v1584 = vand.u32 %v1180, 4294901760
    %1585 = vmatpush1.msra.mxu0 %v1584
    %1586 = vmatprep.subr.mxu0 0.0
    %v1587 = vand.u32 %v1181, 4294901760
    %1588 = vmatpush1.msra.mxu0 %v1587
    %1589 = vmatprep.subr.mxu0 0.0
    %v1590 = vand.u32 %v1182, 4294901760
    %1591 = vmatpush1.msra.mxu0 %v1590
    %1592 = vmatprep.subr.mxu0 0.0
    %v1593 = vand.u32 %v1183, 4294901760
    %1594 = vmatpush1.msra.mxu0 %v1593
    %1595 = vmatprep.subr.mxu0 0.0
    %v1596 = vand.u32 %v1184, 4294901760
    %1597 = vmatpush1.msra.mxu0 %v1596
    %1598 = vmatprep.subr.mxu0 0.0
    %v1599 = vand.u32 %v1185, 4294901760
    %1600 = vmatpush1.msra.mxu0 %v1599
    %1601 = vmatprep.subr.mxu0 0.0
    %v1602 = vand.u32 %v1186, 4294901760
    %1603 = vmatpush1.msra.mxu0 %v1602
    %1604 = vmatprep.subr.mxu0 0.0
    %v1605 = vand.u32 %v1187, 4294901760
    %1606 = vmatpush1.msra.mxu0 %v1605
    %1607 = vmatprep.subr.mxu0 0.0
    %v1608 = vand.u32 %v1188, 4294901760
    %1609 = vmatpush1.msra.mxu0 %v1608
    %1610 = vmatprep.subr.mxu0 0.0
    %v1611 = vand.u32 %v1189, 4294901760
    %1612 = vmatpush1.msra.mxu0 %v1611
    %1613 = vmatprep.subr.mxu0 0.0
    %v1614 = vand.u32 %v1190, 4294901760
    %1615 = vmatpush1.msra.mxu0 %v1614
    %1616 = vmatprep.subr.mxu0 0.0
    %v1617 = vand.u32 %v1191, 4294901760
    %1618 = vmatpush1.msra.mxu0 %v1617
    %1619 = vmatprep.subr.mxu0 0.0
    %v1620 = vand.u32 %v1192, 4294901760
    %1621 = vmatpush1.msra.mxu0 %v1620
    %1622 = vmatprep.subr.mxu0 0.0
    %1623 = vmatpush1.msra.mxu0 0.0
    %1624 = vmatprep.subr.mxu0 0.0
    %1625 = vmatpush1.msra.mxu0 0.0
    %1626 = vmatprep.subr.mxu0 0.0
    %1627 = vmatpush1.msra.mxu0 0.0
    %1628 = vmatprep.subr.mxu0 0.0
    %1629 = vmatpush1.msra.mxu0 0.0
    %1630 = vmatprep.subr.mxu0 0.0
    %1631 = vmatpush1.msra.mxu0 0.0
    %1632 = vmatprep.subr.mxu0 0.0
    %1633 = vmatpush1.msra.mxu0 0.0
    %1634 = vmatprep.subr.mxu0 0.0
    %1635 = vmatpush1.msra.mxu0 0.0
    %1636 = vmatprep.subr.mxu0 0.0
    %1637 = vmatpush1.msra.mxu0 0.0
    %1638 = vmatprep.subr.mxu0 0.0
    %1639 = vmatpush1.msra.mxu0 0.0
    %1640 = vmatprep.subr.mxu0 0.0
    %1641 = vmatpush1.msra.mxu0 0.0
    %1642 = vmatprep.subr.mxu0 0.0
    %1643 = vmatpush1.msra.mxu0 0.0
    %1644 = vmatprep.subr.mxu0 0.0
    %1645 = vmatpush1.msra.mxu0 0.0
    %1646 = vmatprep.subr.mxu0 0.0
    %1647 = vmatpush1.msra.mxu0 0.0
    %1648 = vmatprep.subr.mxu0 0.0
    %1649 = vmatpush1.msra.mxu0 0.0
    %1650 = vmatprep.subr.mxu0 0.0
    %1651 = vmatpush1.msra.mxu0 0.0
    %1652 = vmatprep.subr.mxu0 0.0
    %1653 = vmatpush1.msra.mxu0 0.0
    %1654 = vmatprep.mubr.f32.mxu0 0.0
    %v1655 = vand.u32 %v1203, 4294901760
    %v1656 = vsub.f32 %v1203, %v1655
    %v1657 = vand.u32 %v1656, 4294901760
    %1658 = vmatmul.mubr.f32.gmra.mrb[0].mxu0 %v1657
    %v1659 = vpop.f32.mrb[0].mxu0
    %v1660 = vadd.f32 %v1564, %v1659
    %v1661 = vpop.f32.mrb[0].mxu0
    %1662 = vmatprep.mubr.f32.mxu0 0.0
    %v1663 = vand.u32 %v1204, 4294901760
    %v1664 = vsub.f32 %v1204, %v1663
    %v1665 = vand.u32 %v1664, 4294901760
    %1666 = vmatmul.mubr.f32.gmra.mrb[0].mxu0 %v1665
    %v1667 = vpop.f32.mrb[0].mxu0
    %v1668 = vadd.f32 %v1571, %v1667
    %v1669 = vpop.f32.mrb[0].mxu0
    %1670 = vdwg.mxu0
    %1671 = vmatprep.subr.mxu0 0.0
    %v1672 = vand.u32 %v1177, 4294901760
    %v1673 = vsub.f32 %v1177, %v1672
    %v1674 = vand.u32 %v1673, 4294901760
    %1675 = vmatpush1.msra.mxu0 %v1674
    %1676 = vmatprep.subr.mxu0 0.0
    %v1677 = vand.u32 %v1178, 4294901760
    %v1678 = vsub.f32 %v1178, %v1677
    %v1679 = vand.u32 %v1678, 4294901760
    %1680 = vmatpush1.msra.mxu0 %v1679
    %1681 = vmatprep.subr.mxu0 0.0
    %v1682 = vand.u32 %v1179, 4294901760
    %v1683 = vsub.f32 %v1179, %v1682
    %v1684 = vand.u32 %v1683, 4294901760
    %1685 = vmatpush1.msra.mxu0 %v1684
    %1686 = vmatprep.subr.mxu0 0.0
    %v1687 = vand.u32 %v1180, 4294901760
    %v1688 = vsub.f32 %v1180, %v1687
    %v1689 = vand.u32 %v1688, 4294901760
    %1690 = vmatpush1.msra.mxu0 %v1689
    %1691 = vmatprep.subr.mxu0 0.0
    %v1692 = vand.u32 %v1181, 4294901760
    %v1693 = vsub.f32 %v1181, %v1692
    %v1694 = vand.u32 %v1693, 4294901760
    %1695 = vmatpush1.msra.mxu0 %v1694
    %1696 = vmatprep.subr.mxu0 0.0
    %v1697 = vand.u32 %v1182, 4294901760
    %v1698 = vsub.f32 %v1182, %v1697
    %v1699 = vand.u32 %v1698, 4294901760
    %1700 = vmatpush1.msra.mxu0 %v1699
    %1701 = vmatprep.subr.mxu0 0.0
    %v1702 = vand.u32 %v1183, 4294901760
    %v1703 = vsub.f32 %v1183, %v1702
    %v1704 = vand.u32 %v1703, 4294901760
    %1705 = vmatpush1.msra.mxu0 %v1704
    %1706 = vmatprep.subr.mxu0 0.0
    %v1707 = vand.u32 %v1184, 4294901760
    %v1708 = vsub.f32 %v1184, %v1707
    %v1709 = vand.u32 %v1708, 4294901760
    %1710 = vmatpush1.msra.mxu0 %v1709
    %1711 = vmatprep.subr.mxu0 0.0
    %v1712 = vand.u32 %v1185, 4294901760
    %v1713 = vsub.f32 %v1185, %v1712
    %v1714 = vand.u32 %v1713, 4294901760
    %1715 = vmatpush1.msra.mxu0 %v1714
    %1716 = vmatprep.subr.mxu0 0.0
    %v1717 = vand.u32 %v1186, 4294901760
    %v1718 = vsub.f32 %v1186, %v1717
    %v1719 = vand.u32 %v1718, 4294901760
    %1720 = vmatpush1.msra.mxu0 %v1719
    %1721 = vmatprep.subr.mxu0 0.0
    %v1722 = vand.u32 %v1187, 4294901760
    %v1723 = vsub.f32 %v1187, %v1722
    %v1724 = vand.u32 %v1723, 4294901760
    %1725 = vmatpush1.msra.mxu0 %v1724
    %1726 = vmatprep.subr.mxu0 0.0
    %v1727 = vand.u32 %v1188, 4294901760
    %v1728 = vsub.f32 %v1188, %v1727
    %v1729 = vand.u32 %v1728, 4294901760
    %1730 = vmatpush1.msra.mxu0 %v1729
    %1731 = vmatprep.subr.mxu0 0.0
    %v1732 = vand.u32 %v1189, 4294901760
    %v1733 = vsub.f32 %v1189, %v1732
    %v1734 = vand.u32 %v1733, 4294901760
    %1735 = vmatpush1.msra.mxu0 %v1734
    %1736 = vmatprep.subr.mxu0 0.0
    %v1737 = vand.u32 %v1190, 4294901760
    %v1738 = vsub.f32 %v1190, %v1737
    %v1739 = vand.u32 %v1738, 4294901760
    %1740 = vmatpush1.msra.mxu0 %v1739
    %1741 = vmatprep.subr.mxu0 0.0
    %v1742 = vand.u32 %v1191, 4294901760
    %v1743 = vsub.f32 %v1191, %v1742
    %v1744 = vand.u32 %v1743, 4294901760
    %1745 = vmatpush1.msra.mxu0 %v1744
    %1746 = vmatprep.subr.mxu0 0.0
    %v1747 = vand.u32 %v1192, 4294901760
    %v1748 = vsub.f32 %v1192, %v1747
    %v1749 = vand.u32 %v1748, 4294901760
    %1750 = vmatpush1.msra.mxu0 %v1749
    %1751 = vmatprep.subr.mxu0 0.0
    %1752 = vmatpush1.msra.mxu0 0.0
    %1753 = vmatprep.subr.mxu0 0.0
    %1754 = vmatpush1.msra.mxu0 0.0
    %1755 = vmatprep.subr.mxu0 0.0
    %1756 = vmatpush1.msra.mxu0 0.0
    %1757 = vmatprep.subr.mxu0 0.0
    %1758 = vmatpush1.msra.mxu0 0.0
    %1759 = vmatprep.subr.mxu0 0.0
    %1760 = vmatpush1.msra.mxu0 0.0
    %1761 = vmatprep.subr.mxu0 0.0
    %1762 = vmatpush1.msra.mxu0 0.0
    %1763 = vmatprep.subr.mxu0 0.0
    %1764 = vmatpush1.msra.mxu0 0.0
    %1765 = vmatprep.subr.mxu0 0.0
    %1766 = vmatpush1.msra.mxu0 0.0
    %1767 = vmatprep.subr.mxu0 0.0
    %1768 = vmatpush1.msra.mxu0 0.0
    %1769 = vmatprep.subr.mxu0 0.0
    %1770 = vmatpush1.msra.mxu0 0.0
    %1771 = vmatprep.subr.mxu0 0.0
    %1772 = vmatpush1.msra.mxu0 0.0
    %1773 = vmatprep.subr.mxu0 0.0
    %1774 = vmatpush1.msra.mxu0 0.0
    %1775 = vmatprep.subr.mxu0 0.0
    %1776 = vmatpush1.msra.mxu0 0.0
    %1777 = vmatprep.subr.mxu0 0.0
    %1778 = vmatpush1.msra.mxu0 0.0
    %1779 = vmatprep.subr.mxu0 0.0
    %1780 = vmatpush1.msra.mxu0 0.0
    %1781 = vmatprep.subr.mxu0 0.0
    %1782 = vmatpush1.msra.mxu0 0.0
    %1783 = vmatprep.mubr.f32.mxu0 0.0
    %v1784 = vand.u32 %v1203, 4294901760
    %1785 = vmatmul.mubr.f32.gmra.mrb[0].mxu0 %v1784
    %v1786 = vpop.f32.mrb[0].mxu0
    %v1787 = vadd.f32 %v1660, %v1786
    %v1788 = vpop.f32.mrb[0].mxu0
    %1789 = vmatprep.mubr.f32.mxu0 0.0
    %v1790 = vand.u32 %v1204, 4294901760
    %1791 = vmatmul.mubr.f32.gmra.mrb[0].mxu0 %v1790
    %v1792 = vpop.f32.mrb[0].mxu0
    %v1793 = vadd.f32 %v1668, %v1792
    %v1794 = vpop.f32.mrb[0].mxu0
    %1795 = vdwg.mxu0
    %1796 = vmatprep.subr.mxu0 0.0
    %v1797 = vand.u32 %v1177, 4294901760
    %1798 = vmatpush1.msra.mxu0 %v1797
    %1799 = vmatprep.subr.mxu0 0.0
    %v1800 = vand.u32 %v1178, 4294901760
    %1801 = vmatpush1.msra.mxu0 %v1800
    %1802 = vmatprep.subr.mxu0 0.0
    %v1803 = vand.u32 %v1179, 4294901760
    %1804 = vmatpush1.msra.mxu0 %v1803
    %1805 = vmatprep.subr.mxu0 0.0
    %v1806 = vand.u32 %v1180, 4294901760
    %1807 = vmatpush1.msra.mxu0 %v1806
    %1808 = vmatprep.subr.mxu0 0.0
    %v1809 = vand.u32 %v1181, 4294901760
    %1810 = vmatpush1.msra.mxu0 %v1809
    %1811 = vmatprep.subr.mxu0 0.0
    %v1812 = vand.u32 %v1182, 4294901760
    %1813 = vmatpush1.msra.mxu0 %v1812
    %1814 = vmatprep.subr.mxu0 0.0
    %v1815 = vand.u32 %v1183, 4294901760
    %1816 = vmatpush1.msra.mxu0 %v1815
    %1817 = vmatprep.subr.mxu0 0.0
    %v1818 = vand.u32 %v1184, 4294901760
    %1819 = vmatpush1.msra.mxu0 %v1818
    %1820 = vmatprep.subr.mxu0 0.0
    %v1821 = vand.u32 %v1185, 4294901760
    %1822 = vmatpush1.msra.mxu0 %v1821
    %1823 = vmatprep.subr.mxu0 0.0
    %v1824 = vand.u32 %v1186, 4294901760
    %1825 = vmatpush1.msra.mxu0 %v1824
    %1826 = vmatprep.subr.mxu0 0.0
    %v1827 = vand.u32 %v1187, 4294901760
    %1828 = vmatpush1.msra.mxu0 %v1827
    %1829 = vmatprep.subr.mxu0 0.0
    %v1830 = vand.u32 %v1188, 4294901760
    %1831 = vmatpush1.msra.mxu0 %v1830
    %1832 = vmatprep.subr.mxu0 0.0
    %v1833 = vand.u32 %v1189, 4294901760
    %1834 = vmatpush1.msra.mxu0 %v1833
    %1835 = vmatprep.subr.mxu0 0.0
    %v1836 = vand.u32 %v1190, 4294901760
    %1837 = vmatpush1.msra.mxu0 %v1836
    %1838 = vmatprep.subr.mxu0 0.0
    %v1839 = vand.u32 %v1191, 4294901760
    %1840 = vmatpush1.msra.mxu0 %v1839
    %1841 = vmatprep.subr.mxu0 0.0
    %v1842 = vand.u32 %v1192, 4294901760
    %1843 = vmatpush1.msra.mxu0 %v1842
    %1844 = vmatprep.subr.mxu0 0.0
    %1845 = vmatpush1.msra.mxu0 0.0
    %1846 = vmatprep.subr.mxu0 0.0
    %1847 = vmatpush1.msra.mxu0 0.0
    %1848 = vmatprep.subr.mxu0 0.0
    %1849 = vmatpush1.msra.mxu0 0.0
    %1850 = vmatprep.subr.mxu0 0.0
    %1851 = vmatpush1.msra.mxu0 0.0
    %1852 = vmatprep.subr.mxu0 0.0
    %1853 = vmatpush1.msra.mxu0 0.0
    %1854 = vmatprep.subr.mxu0 0.0
    %1855 = vmatpush1.msra.mxu0 0.0
    %1856 = vmatprep.subr.mxu0 0.0
    %1857 = vmatpush1.msra.mxu0 0.0
    %1858 = vmatprep.subr.mxu0 0.0
    %1859 = vmatpush1.msra.mxu0 0.0
    %1860 = vmatprep.subr.mxu0 0.0
    %1861 = vmatpush1.msra.mxu0 0.0
    %1862 = vmatprep.subr.mxu0 0.0
    %1863 = vmatpush1.msra.mxu0 0.0
    %1864 = vmatprep.subr.mxu0 0.0
    %1865 = vmatpush1.msra.mxu0 0.0
    %1866 = vmatprep.subr.mxu0 0.0
    %1867 = vmatpush1.msra.mxu0 0.0
    %1868 = vmatprep.subr.mxu0 0.0
    %1869 = vmatpush1.msra.mxu0 0.0
    %1870 = vmatprep.subr.mxu0 0.0
    %1871 = vmatpush1.msra.mxu0 0.0
    %1872 = vmatprep.subr.mxu0 0.0
    %1873 = vmatpush1.msra.mxu0 0.0
    %1874 = vmatprep.subr.mxu0 0.0
    %1875 = vmatpush1.msra.mxu0 0.0
    %1876 = vmatprep.mubr.f32.mxu0 0.0
    %v1877 = vand.u32 %v1203, 4294901760
    %1878 = vmatmul.mubr.f32.gmra.mrb[0].mxu0 %v1877
    %v1879 = vpop.f32.mrb[0].mxu0
    %v1880 = vadd.f32 %v1787, %v1879
    %v1881 = vpop.f32.mrb[0].mxu0
    %1882 = vmatprep.mubr.f32.mxu0 0.0
    %v1883 = vand.u32 %v1204, 4294901760
    %1884 = vmatmul.mubr.f32.gmra.mrb[0].mxu0 %v1883
    %v1885 = vpop.f32.mrb[0].mxu0
    %v1886 = vadd.f32 %v1793, %v1885
    %v1887 = vpop.f32.mrb[0].mxu0
    %1888 = vdwg.mxu0
    %v1889 = vadd.f32 %v1166, %v1880
    %v1890 = vadd.f32 %v1172, %v1886
    %v1891 = vld [vmem:[%s6] sm:$0xff]
    %v1892 = vld [vmem:[%s6 + $0x8] sm:$0xff]
    %v1893 = vadd.f32 %v1889, %v1891
    %v1894 = vadd.f32 %v1890, %v1892
    %1895 = vst [vmem:[#allocation7] sm:$0xff] %v1893
    %1896 = vst [vmem:[#allocation7 + $0x8] sm:$0xff] %v1894
    // Predicated region
    $region38: #{knob_embedding_forward.1} parent=1 // pred_check
      _
    $region39: #{knob_embedding_forward.1} parent=1 // pred_check_branch
      %1898 = sbr.rel (0) target = $region41
    $region40: #{knob_embedding_forward.1} parent=1 // pred_region
      %s1900 = ssub.s32 256, 256
      %1901 = vsyncadd [#allocation4], %s1900
      %s1902 = sshll.u32 [#allocation7], 4
      %s1903 = int_to_ptr.vmem [resolvable:$true] %s1902
      %1908 = dma.vmem_to_hbm [thread:$0]  %s1903, 256, %s7, [#allocation4], 128, 128, 8
    $region41: #{knob_embedding_forward.1} parent=1 // pred_fallthru
      _
    // Predicated region
    $region42: #{knob_embedding_forward.1} parent=1 // pred_check
      _
    $region43: #{knob_embedding_forward.1} parent=1 // pred_check_branch
      %1910 = sbr.rel (0) target = $region45
    $region44: #{knob_embedding_forward.1} parent=1 // pred_region
      %1911 = dma.done [#allocation4], 256
    $region45: #{knob_embedding_forward.1} parent=1 // pred_fallthru
      _
    %1912 = vsyncpa [#allocation3], 1
    %1913 = vsyncpa [#allocation6], 1
    %1914 = vsyncpa [#allocation4], 1

</llo_original>
